<compile_context>
chip_gen: v5e
topology: v5e:2x2
jax: 0.10.0
libtpu: 0.0.40
codegen_flags: <defaults>
</compile_context>

<pallas_src>
import functools

import jax
import jax.numpy as jnp
from jax import lax
from jax.experimental import pallas as pl
from jax.experimental.pallas import tpu as pltpu

_LN_EPS = 1e-5


# ---------------------------------------------------------------------------
# Kernel
# ---------------------------------------------------------------------------
def _pair_transition_kernel(*refs, pack, hidden_bf16, high_prec):
    if pack > 1:
        z_ref, m_ref, w1_ref, b1_ref, w2_ref, b2_ref, o_ref = refs
    else:
        z_ref, w1_ref, b1_ref, w2_ref, b2_ref, o_ref = refs

    x = z_ref[...].astype(jnp.float32)                      # (TM, P*C)

    # ---- LayerNorm statistics over each c_z segment of the lane axis ----
    if pack == 1:
        mean = jnp.mean(x, axis=-1, keepdims=True)
        centered = x - mean
        var = jnp.mean(centered * centered, axis=-1, keepdims=True)
    else:
        prec = lax.Precision.HIGHEST if high_prec else None
        m = m_ref[...]                                       # (P*C, P*C) block-avg
        mean = jnp.dot(x, m, precision=prec,
                       preferred_element_type=jnp.float32)
        ex2 = jnp.dot(x * x, m, precision=prec,
                      preferred_element_type=jnp.float32)
        var = jnp.maximum(ex2 - mean * mean, 0.0)
        centered = x - mean
    zn = centered * jax.lax.rsqrt(var + _LN_EPS)             # affine folded into w1/b1

    # ---- Linear1 + ReLU (bf16 MXU inputs, f32 accumulate) ----
    h = jnp.dot(zn.astype(jnp.bfloat16), w1_ref[...],
                preferred_element_type=jnp.float32)          # (TM, P*H)
    if hidden_bf16:
        h = jnp.maximum(h.astype(jnp.bfloat16) + b1_ref[...], 0)
    else:
        h = jnp.maximum(h + b1_ref[...], 0.0).astype(jnp.bfloat16)

    # ---- Linear2 + residual add (f32) ----
    upd = jnp.dot(h, w2_ref[...], preferred_element_type=jnp.float32)
    o_ref[...] = (x + upd + b2_ref[...]).astype(o_ref.dtype)


# ---------------------------------------------------------------------------
# Host-side helpers
# ---------------------------------------------------------------------------
def _tpu_flags():
    """Generation-aware precision / VMEM settings."""
    try:
        kind = jax.devices()[0].device_kind.lower()
    except Exception:
        kind = ""
    is_v5 = "v5" in kind
    is_v7 = "v7" in kind
    try:
        vmem_cap = int(pltpu.get_tpu_info().vmem_capacity_bytes)
    except Exception:
        vmem_cap = (64 if is_v7 else 128) * 1024 * 1024
    vmem_limit = min(vmem_cap * 3 // 4, 100 * 1024 * 1024)
    return {
        "hidden_bf16": not is_v5,      # v5e has no bf16 VALU
        "high_prec_stats": not is_v5,  # keep LN-stat dots f32-accurate on v6e/v7x
        "vmem_limit": int(vmem_limit),
    }


def _choose_tile_m(rows, lane_in, lane_hidden, pack, budget_bytes):
    """Largest row tile (<=1024) that fits VMEM with a grid of >=8 steps."""
    if rows <= 8:
        return rows
    # 2x-buffered bf16 weight blocks (+ f32 averaging matrix when packed).
    fixed = 2 * 2 * (lane_in * lane_hidden + lane_hidden * lane_in)
    if pack > 1:
        fixed += 2 * lane_in * lane_in * 4
    per_row = (2 * lane_in * 4        # input tile, double-buffered f32
               + 2 * lane_in * 4      # output tile, double-buffered f32
               + 3 * lane_in * 4      # LN temporaries (x, mean/var, zn)
               + lane_in * 2          # zn bf16 copy
               + lane_hidden * 6)     # hidden activation (f32 dot + bf16 copy)
    best = None
    for tm in (1024, 512, 256, 128, 64, 32, 16, 8):
        if tm > rows:
            continue
        need = int((fixed + tm * per_row) * 1.25)   # +25% Mosaic scratch headroom
        if need > budget_bytes:
            continue
        grid = -(-rows // tm)
        score = (min(grid, 8), grid % 2 == 0, tm)
        if best is None or score > best[0]:
            best = (score, tm)
    return best[1] if best is not None else 8


def pair_transition(z, mask, gamma, beta, w1, b1, w2, b2, *, tile_m=None):
    """Fused PairTransition forward.

    Args:
      z:     [B, N, N, C] float32
      mask:  [B, N, N]    (unused -- matches reference implementation)
      gamma, beta: [C]           LayerNorm affine params
      w1: [C, H]  b1: [H]        linear_1 (stored transposed: x @ w1)
      w2: [H, C]  b2: [C]        linear_2 (stored transposed: h @ w2)
    Returns:
      [B, N, N, C] float32
    """
    del mask  # TODO(synk): mask is accepted but never used by the reference forward.
    B, N1, N2, C = z.shape
    H = w1.shape[1]
    R = B * N1 * N2
    flags = _tpu_flags()
    hidden_bf16 = flags["hidden_bf16"]

    # Lane packing only when it is an exact (free) reshape: P consecutive pair
    # rows are placed on the 128-lane axis.
    P = 1
    if C < 128 and 128 % C == 0 and R % (128 // C) == 0:
        P = 128 // C
    Lc, Lh = P * C, P * H
    rows = R // P

    if tile_m is None:
        tile_m = _choose_tile_m(rows, Lc, Lh, P, flags["vmem_limit"])
    grid_m = -(-rows // tile_m)   # over-cover; partial last block is masked by Pallas

    f32 = jnp.float32
    zp = z.reshape(rows, Lc)      # contiguous -> metadata-only reshape (no HBM copy)

    # Fold LayerNorm affine into linear_1; build block-diagonal packed weights.
    gamma32, beta32 = gamma.astype(f32), beta.astype(f32)
    w1f = gamma32[:, None] * w1.astype(f32)          # (C, H)
    b1f = b1.astype(f32) + beta32 @ w1.astype(f32)   # (H,)
    if P > 1:
        eye = jnp.eye(P, dtype=f32)
        w1p = jnp.kron(eye, w1f).astype(jnp.bfloat16)              # (Lc, Lh)
        w2p = jnp.kron(eye, w2.astype(f32)).astype(jnp.bfloat16)   # (Lh, Lc)
        b1p = jnp.tile(b1f, P).reshape(1, Lh)
        b2p = jnp.tile(b2.astype(f32), P).reshape(1, Lc)
        mavg = jnp.kron(eye, jnp.full((C, C), 1.0 / C, f32))       # (Lc, Lc)
    else:
        w1p = w1f.astype(jnp.bfloat16)
        w2p = w2.astype(jnp.bfloat16)
        b1p = b1f.reshape(1, Lh)
        b2p = b2.astype(f32).reshape(1, Lc)
        mavg = None
    b1p = b1p.astype(jnp.bfloat16 if hidden_bf16 else f32)

    in_specs = [pl.BlockSpec((tile_m, Lc), lambda i: (i, 0))]
    args = [zp]
    if P > 1:
        in_specs.append(pl.BlockSpec((Lc, Lc), lambda i: (0, 0)))
        args.append(mavg)
    in_specs += [
        pl.BlockSpec((Lc, Lh), lambda i: (0, 0)),   # w1 (block-diag, bf16)
        pl.BlockSpec((1, Lh), lambda i: (0, 0)),    # b1 (affine folded)
        pl.BlockSpec((Lh, Lc), lambda i: (0, 0)),   # w2 (block-diag, bf16)
        pl.BlockSpec((1, Lc), lambda i: (0, 0)),    # b2
    ]
    args += [w1p, b1p, w2p, b2p]

    kernel = functools.partial(
        _pair_transition_kernel,
        pack=P,
        hidden_bf16=hidden_bf16,
        high_prec=flags["high_prec_stats"],
    )

    cost = pl.CostEstimate(
        flops=4 * R * P * C * H + (4 * R * P * C * C if P > 1 else 0),
        transcendentals=R * C,
        bytes_accessed=8 * R * C + 4 * Lc * Lh + (4 * Lc * Lc if P > 1 else 0),
    )

    out_p = pl.pallas_call(
        kernel,
        out_shape=jax.ShapeDtypeStruct((rows, Lc), z.dtype),
        grid_spec=pltpu.PrefetchScalarGridSpec(
            num_scalar_prefetch=0,
            grid=(grid_m,),
            in_specs=in_specs,
            out_specs=pl.BlockSpec((tile_m, Lc), lambda i: (i, 0)),
        ),
        compiler_params=pltpu.CompilerParams(
            dimension_semantics=("parallel",),
            vmem_limit_bytes=int(flags["vmem_limit"])),
        cost_estimate=cost,
    )(*args)

    return out_p.reshape(B, N1, N2, C)


# ---------------------------------------------------------------------------
# References
# ---------------------------------------------------------------------------
def _reference(z, gamma, beta, w1, b1, w2, b2):
    """Pure-JAX f32 reference."""
    mean = jnp.mean(z, axis=-1, keepdims=True)
    var = jnp.mean((z - mean) ** 2, axis=-1, keepdims=True)
    zn = (z - mean) * jax.lax.rsqrt(var + _LN_EPS) * gamma + beta
    h = jnp.maximum(zn @ w1 + b1, 0.0)
    return z + (h @ w2 + b2)


def _reference_matched(z, gamma, beta, w1, b1, w2, b2, *, hidden_bf16):
    """Reference mirroring the kernel's precision (bf16 MXU inputs, folded affine)."""
    f32 = jnp.float32
    mean = jnp.mean(z, axis=-1, keepdims=True)
    var = jnp.mean((z - mean) ** 2, axis=-1, keepdims=True)
    zn = (z - mean) * jax.lax.rsqrt(var + _LN_EPS)
    w1f = (gamma[:, None] * w1).astype(jnp.bfloat16)
    b1f = b1 + beta @ w1
    h = jnp.dot(zn.astype(jnp.bfloat16), w1f, preferred_element_type=f32)
    if hidden_bf16:
        h = jnp.maximum(h.astype(jnp.bfloat16) + b1f.astype(jnp.bfloat16), 0)
        h = h.astype(jnp.bfloat16)
    else:
        h = jnp.maximum(h + b1f, 0.0).astype(jnp.bfloat16)
    upd = jnp.dot(h, w2.astype(jnp.bfloat16), preferred_element_type=f32)
    return z + upd + b2


# ---------------------------------------------------------------------------
# Demo / self-test
# ---------------------------------------------------------------------------
if __name__ == "__main__":
    # Small shapes consistent with the module: batch=2, N_res=16, c_z=32, n=4.
    B, N, C, n_mult = 2, 16, 32, 4
    H = n_mult * C

    key = jax.random.PRNGKey(0)
    kz, kg, kb, kw1, kb1, kw2, kb2, km = jax.random.split(key, 8)

    z = jax.random.normal(kz, (B, N, N, C), dtype=jnp.float32)
    mask = (jax.random.uniform(km, (B, N, N)) > 0.1).astype(jnp.float32)

    # Deterministic synthetic parameters (shapes match the nn.Module).
    gamma = 1.0 + 0.1 * jax.random.normal(kg, (C,), dtype=jnp.float32)
    beta = 0.1 * jax.random.normal(kb, (C,), dtype=jnp.float32)
    # linear_1: PyTorch weight [H, C] stored transposed [C, H]; init='relu'
    w1 = jax.random.normal(kw1, (C, H), dtype=jnp.float32) * (2.0 / C) ** 0.5
    b1 = 0.01 * jax.random.normal(kb1, (H,), dtype=jnp.float32)
    # linear_2: PyTorch weight [C, H] stored transposed [H, C]; init='final'
    # (real module zero-inits 'final'; small random keeps the test non-trivial)
    w2 = 0.02 * jax.random.normal(kw2, (H, C), dtype=jnp.float32)
    b2 = 0.01 * jax.random.normal(kb2, (C,), dtype=jnp.float32)

    out = pair_transition(z, mask, gamma, beta, w1, b1, w2, b2)
    out = jax.block_until_ready(out)

    assert out.shape == z.shape and out.dtype == z.dtype

    flags = _tpu_flags()
    ref_bf = _reference_matched(z, gamma, beta, w1, b1, w2, b2,
                                hidden_bf16=flags["hidden_bf16"])
    ref_32 = _reference(z, gamma, beta, w1, b1, w2, b2)
    assert jnp.allclose(out, ref_bf, atol=2e-2, rtol=2e-2), \
        "mismatch vs precision-matched reference"
    assert jnp.allclose(out, ref_32, atol=3e-2, rtol=3e-2), \
        "mismatch vs f32 reference"

    print("KERNEL_OK")
</pallas_src>

<mosaic_0001>
module attributes {stable_mosaic.version = 11 : i64} {
  func.func @_pair_transition_kernel(%arg0: i32, %arg1: memref<16x128xf32, #tpu.memory_space<vmem>>, %arg2: memref<128x128xf32, #tpu.memory_space<vmem>>, %arg3: memref<128x512xbf16, #tpu.memory_space<vmem>>, %arg4: memref<1x512xbf16, #tpu.memory_space<vmem>>, %arg5: memref<512x128xbf16, #tpu.memory_space<vmem>>, %arg6: memref<1x128xf32, #tpu.memory_space<vmem>>, %arg7: memref<16x128xf32, #tpu.memory_space<vmem>>) attributes {dimension_semantics = [#tpu.dimension_semantics<parallel>], iteration_bounds = array<i64: 8>, scalar_prefetch = 0 : i64, scratch_operands = 0 : i64, tpu.core_type = #tpu.core_type<tc>, window_params = [{transform_indices = @transform_0, window_bounds = array<i64: 16, 128>}, {pipeline_mode = #tpu.pipeline_mode<synchronous>, transform_indices = @transform_1, window_bounds = array<i64: 128, 128>}, {pipeline_mode = #tpu.pipeline_mode<synchronous>, transform_indices = @transform_2, window_bounds = array<i64: 128, 512>}, {pipeline_mode = #tpu.pipeline_mode<synchronous>, transform_indices = @transform_3, window_bounds = array<i64: 1, 512>}, {pipeline_mode = #tpu.pipeline_mode<synchronous>, transform_indices = @transform_4, window_bounds = array<i64: 512, 128>}, {pipeline_mode = #tpu.pipeline_mode<synchronous>, transform_indices = @transform_5, window_bounds = array<i64: 1, 128>}, {transform_indices = @transform_6, window_bounds = array<i64: 16, 128>}]} {
    %c0 = arith.constant 0 : index
    %c0_0 = arith.constant 0 : index
    %0 = vector.load %arg1[%c0, %c0_0] : memref<16x128xf32, #tpu.memory_space<vmem>>, vector<16x128xf32>
    %c0_1 = arith.constant 0 : index
    %c0_2 = arith.constant 0 : index
    %1 = vector.load %arg2[%c0_1, %c0_2] : memref<128x128xf32, #tpu.memory_space<vmem>>, vector<128x128xf32>
    %cst = arith.constant dense<0.000000e+00> : vector<16x128xf32>
    %2 = tpu.matmul %0, %1, %cst {dimension_numbers = #tpu.dot_dimension_numbers<[1], [0], [0], [1], [0, 0, 1, 1], [], []>, precision = #tpu.contract_precision<fp32>} : vector<16x128xf32>, vector<128x128xf32>, vector<16x128xf32> -> vector<16x128xf32>
    %3 = arith.mulf %0, %0 : vector<16x128xf32>
    %cst_3 = arith.constant dense<0.000000e+00> : vector<16x128xf32>
    %4 = tpu.matmul %3, %1, %cst_3 {dimension_numbers = #tpu.dot_dimension_numbers<[1], [0], [0], [1], [0, 0, 1, 1], [], []>, precision = #tpu.contract_precision<fp32>} : vector<16x128xf32>, vector<128x128xf32>, vector<16x128xf32> -> vector<16x128xf32>
    %5 = arith.mulf %2, %2 : vector<16x128xf32>
    %6 = arith.subf %4, %5 : vector<16x128xf32>
    %cst_4 = arith.constant 0.000000e+00 : f32
    %7 = vector.broadcast %cst_4 : f32 to vector<16x128xf32>
    %8 = arith.maximumf %6, %7 : vector<16x128xf32>
    %9 = arith.subf %0, %2 : vector<16x128xf32>
    %cst_5 = arith.constant 9.99999974E-6 : f32
    %10 = vector.broadcast %cst_5 : f32 to vector<16x128xf32>
    %11 = arith.addf %8, %10 : vector<16x128xf32>
    %12 = math.rsqrt %11 : vector<16x128xf32>
    %13 = arith.mulf %9, %12 : vector<16x128xf32>
    %14 = arith.truncf %13 : vector<16x128xf32> to vector<16x128xbf16>
    %c0_6 = arith.constant 0 : index
    %c0_7 = arith.constant 0 : index
    %15 = vector.load %arg3[%c0_6, %c0_7] : memref<128x512xbf16, #tpu.memory_space<vmem>>, vector<128x512xbf16>
    %cst_8 = arith.constant dense<0.000000e+00> : vector<16x512xf32>
    %16 = tpu.matmul %14, %15, %cst_8 {dimension_numbers = #tpu.dot_dimension_numbers<[1], [0], [0], [1], [0, 0, 1, 1], [], []>} : vector<16x128xbf16>, vector<128x512xbf16>, vector<16x512xf32> -> vector<16x512xf32>
    %17 = arith.truncf %16 : vector<16x512xf32> to vector<16x512xbf16>
    %c0_9 = arith.constant 0 : index
    %c0_10 = arith.constant 0 : index
    %18 = vector.load %arg4[%c0_9, %c0_10] : memref<1x512xbf16, #tpu.memory_space<vmem>>, vector<1x512xbf16>
    %19 = vector.broadcast %18 : vector<1x512xbf16> to vector<16x512xbf16>
    %20 = arith.addf %17, %19 : vector<16x512xbf16>
    %cst_11 = arith.constant 0.000000e+00 : bf16
    %21 = vector.broadcast %cst_11 : bf16 to vector<16x512xbf16>
    %22 = arith.maximumf %20, %21 : vector<16x512xbf16>
    %c0_12 = arith.constant 0 : index
    %c0_13 = arith.constant 0 : index
    %23 = vector.load %arg5[%c0_12, %c0_13] : memref<512x128xbf16, #tpu.memory_space<vmem>>, vector<512x128xbf16>
    %cst_14 = arith.constant dense<0.000000e+00> : vector<16x128xf32>
    %24 = tpu.matmul %22, %23, %cst_14 {dimension_numbers = #tpu.dot_dimension_numbers<[1], [0], [0], [1], [0, 0, 1, 1], [], []>} : vector<16x512xbf16>, vector<512x128xbf16>, vector<16x128xf32> -> vector<16x128xf32>
    %25 = arith.addf %0, %24 : vector<16x128xf32>
    %c0_15 = arith.constant 0 : index
    %c0_16 = arith.constant 0 : index
    %26 = vector.load %arg6[%c0_15, %c0_16] : memref<1x128xf32, #tpu.memory_space<vmem>>, vector<1x128xf32>
    %27 = vector.broadcast %26 : vector<1x128xf32> to vector<16x128xf32>
    %28 = arith.addf %25, %27 : vector<16x128xf32>
    %c0_17 = arith.constant 0 : index
    %c0_18 = arith.constant 0 : index
    %29 = vector.load %arg7[%c0_17, %c0_18] : memref<16x128xf32, #tpu.memory_space<vmem>>, vector<16x128xf32>
    tpu.vector_store %arg7[%c0_17, %c0_18], %28 {strides = array<i32>} : memref<16x128xf32, #tpu.memory_space<vmem>>, vector<16x128xf32>,
    return
  }
  func.func @transform_0(%arg0: i32) -> (i32, i32) {
    %c0_i32 = arith.constant 0 : i32
    %c0_i32_0 = arith.constant 0 : i32
    return %arg0, %c0_i32 : i32, i32
  }
  func.func @transform_1(%arg0: i32) -> (i32, i32) {
    %c0_i32 = arith.constant 0 : i32
    %c0_i32_0 = arith.constant 0 : i32
    %c0_i32_1 = arith.constant 0 : i32
    return %c0_i32, %c0_i32_0 : i32, i32
  }
  func.func @transform_2(%arg0: i32) -> (i32, i32) {
    %c0_i32 = arith.constant 0 : i32
    %c0_i32_0 = arith.constant 0 : i32
    %c0_i32_1 = arith.constant 0 : i32
    return %c0_i32, %c0_i32_0 : i32, i32
  }
  func.func @transform_3(%arg0: i32) -> (i32, i32) {
    %c0_i32 = arith.constant 0 : i32
    %c0_i32_0 = arith.constant 0 : i32
    %c0_i32_1 = arith.constant 0 : i32
    return %c0_i32, %c0_i32_0 : i32, i32
  }
  func.func @transform_4(%arg0: i32) -> (i32, i32) {
    %c0_i32 = arith.constant 0 : i32
    %c0_i32_0 = arith.constant 0 : i32
    %c0_i32_1 = arith.constant 0 : i32
    return %c0_i32, %c0_i32_0 : i32, i32
  }
  func.func @transform_5(%arg0: i32) -> (i32, i32) {
    %c0_i32 = arith.constant 0 : i32
    %c0_i32_0 = arith.constant 0 : i32
    %c0_i32_1 = arith.constant 0 : i32
    return %c0_i32, %c0_i32_0 : i32, i32
  }
  func.func @transform_6(%arg0: i32) -> (i32, i32) {
    %c0_i32 = arith.constant 0 : i32
    %c0_i32_0 = arith.constant 0 : i32
    return %arg0, %c0_i32 : i32, i32
  }
}

</mosaic_0001>

<llo_original>
// kernel: tpu_custom_call.1
$region0: #{tpu_custom_call.1}
  #allocation0 [shape = 'u32[]', space=smem, size = 0x4, offset = 0x4, fixed_abs, tag = 'smem constant byte address 0x4 - core index']
  #allocation1 [shape = 'u32[72,128]{1,0:T(1,128)}', space=vmem, size = 0x9000, scoped, tag = 'internal scratch']
  %s0 = inlined_call_operand.hbm [shape: f32[128,128], index: 0, kind: input, shape index: {}]
  %s1 = inlined_call_operand.hbm [shape: f32[128,128], index: 1, kind: input, shape index: {}]
  %s2 = inlined_call_operand.hbm [shape: bf16[128,512], index: 2, kind: input, shape index: {}]
  %s3 = inlined_call_operand.hbm [shape: bf16[1,512], index: 3, kind: input, shape index: {}]
  %s4 = inlined_call_operand.hbm [shape: bf16[512,128], index: 4, kind: input, shape index: {}]
  %s5 = inlined_call_operand.vmem [shape: f32[1,128], index: 5, kind: input, shape index: {}]
  %s6 = inlined_call_operand.hbm [shape: f32[128,128], index: 6, kind: output, shape index: {}]
  %s7 = sld [smem:[#allocation0]]
  $region77: #{tpu_custom_call.1} parent=0
    _
  %s9 = ssub.s32 1, %s7
  %s10 = scalar_select 0, %s9, %s7
  $region1: #{tpu_custom_call.1} parent=0
    #allocation2 [shape = 'u8[16384]{0}', space=vmem, size = 0x4000, scoped, tag = 'input window, operand 0']
    #allocation3 [shape = 's32[2]{0}', space=sflag, size = 0x8, scoped, tag = 'scoped memory for tpu_custom_call.1']
    #allocation4 [shape = 's32[2]{0}', space=sflag, size = 0x8, scoped, tag = 'scoped memory for tpu_custom_call.1']
    #allocation5 [shape = 'u8[65536]{0}', space=vmem, size = 0x10000, scoped, tag = 'input window, operand 1, single buffered']
    #allocation6 [shape = 's32[1]{0}', space=sflag, size = 0x4, scoped, tag = 'scoped memory for tpu_custom_call.1']
    #allocation7 [shape = 'u8[131072]{0}', space=vmem, size = 0x20000, scoped, tag = 'input window, operand 2, single buffered']
    #allocation8 [shape = 'u8[2048]{0}', space=vmem, size = 0x800, scoped, tag = 'input window, operand 3, single buffered']
    #allocation9 [shape = 's32[1]{0}', space=sflag, size = 0x4, scoped, tag = 'scoped memory for tpu_custom_call.1']
    #allocation10 [shape = 'u8[131072]{0}', space=vmem, size = 0x20000, scoped, tag = 'input window, operand 4, single buffered']
    #allocation11 [shape = 'u8[16384]{0}', space=vmem, size = 0x4000, scoped, tag = 'output window, operand 0']
    %11 = vsyncpa [#allocation3], 0
    %s12 = scalar_lea.sflag [#allocation3], 1
    %13 = vsyncpa %s12, 0
    %14 = vsyncpa [#allocation6], 0
    %15 = vsyncpa [#allocation9], 0
    %16 = vsyncpa [#allocation4], 0
    %s17 = scalar_lea.sflag [#allocation4], 1
    %18 = vsyncpa %s17, 0
    loop: start=0, step=1, limit=10
    $region2: #{tpu_custom_call.1} parent=1 // loop_pre_header
      _
    $region3: #{tpu_custom_call.1} parent=1 // loop_header
      %s20 = sphi 0, %s24
      %p21 = scmp.ge.s32.totalorder %s20, 10
      %s30 = sphi 0, %s32
      %s33 = sphi 0, %s30
      %s34 = sphi 0, %s33
      %s50 = sphi 0, %s34
      %s54 = sphi 0, %s54
      %s56 = sphi 0, %s54
      %s57 = sphi 0, %s56
      %s71 = sphi 0, %s57
      %s75 = sphi 0, %s75
      %s77 = sphi 0, %s75
      %s78 = sphi 0, %s77
      %s92 = sphi 0, %s78
      %s96 = sphi 0, %s96
      %s98 = sphi 0, %s96
      %s99 = sphi 0, %s98
      %s113 = sphi 0, %s99
      %s117 = sphi 0, %s117
      %s119 = sphi 0, %s117
      %s120 = sphi 0, %s119
      %s134 = sphi 0, %s120
      %s138 = sphi 0, %s138
      %s140 = sphi 0, %s138
      %s141 = sphi 0, %s140
      %s155 = sphi 0, %s141
      %s161 = sphi 0, %s163
      %s164 = sphi 0, %s161
      %s165 = sphi 0, %s164
      %s181 = sphi 0, %s165
    $region4: #{tpu_custom_call.1} parent=1 // loop_header_branch
      %23 = sbr.rel (%p21) target = $region8
    $region5: #{tpu_custom_call.1} parent=1 // loop_body
      %s25 = ssub.s32 %s20, 1
      %s26 = ssub.s32 %s20, 2
      %s27 = sadd.s32 %s20, 1
      %s28 = ssub.s32 %s20, %s27
      %p29 = scmp.eq.s32.totalorder %s28, 0
      %s31 = sadd.s32 %s30, 1
      %s32 = scalar_select %p29, %s30, %s31
      %p35 = pneg %p29
      %p36 = scmp.eq.s32.totalorder %s20, 7
      %p37 = por %p35, %p36
      %p38 = scmp.ne.s32.totalorder %s30, %s33
      %p39 = scmp.eq.s32.totalorder %s20, 0
      %p40 = por %p38, %p39
      %p41 = scmp.ne.s32.totalorder %s30, %s33
      %p42 = scmp.eq.s32.totalorder %s25, 7
      %p43 = por %p41, %p42
      %p44 = scmp.ne.s32.totalorder %s33, %s34
      %p45 = scmp.eq.s32.totalorder %s25, 0
      %p46 = por %p44, %p45
      %p47 = scmp.ne.s32.totalorder %s33, %s34
      %p48 = scmp.eq.s32.totalorder %s26, 7
      %p49 = por %p47, %p48
      %p51 = scmp.ne.s32.totalorder %s34, %s50
      %p52 = scmp.eq.s32.totalorder %s26, 0
      %p53 = por %p51, %p52
      %s55 = sadd.s32 %s54, 1
      %p58 = scmp.eq.s32.totalorder %s20, 7
      %p59 = scmp.ne.s32.totalorder %s54, %s56
      %p60 = scmp.eq.s32.totalorder %s20, 0
      %p61 = por %p59, %p60
      %p62 = scmp.ne.s32.totalorder %s54, %s56
      %p63 = scmp.eq.s32.totalorder %s25, 7
      %p64 = por %p62, %p63
      %p65 = scmp.ne.s32.totalorder %s56, %s57
      %p66 = scmp.eq.s32.totalorder %s25, 0
      %p67 = por %p65, %p66
      %p68 = scmp.ne.s32.totalorder %s56, %s57
      %p69 = scmp.eq.s32.totalorder %s26, 7
      %p70 = por %p68, %p69
      %p72 = scmp.ne.s32.totalorder %s57, %s71
      %p73 = scmp.eq.s32.totalorder %s26, 0
      %p74 = por %p72, %p73
      %s76 = sadd.s32 %s75, 1
      %p79 = scmp.eq.s32.totalorder %s20, 7
      %p80 = scmp.ne.s32.totalorder %s75, %s77
      %p81 = scmp.eq.s32.totalorder %s20, 0
      %p82 = por %p80, %p81
      %p83 = scmp.ne.s32.totalorder %s75, %s77
      %p84 = scmp.eq.s32.totalorder %s25, 7
      %p85 = por %p83, %p84
      %p86 = scmp.ne.s32.totalorder %s77, %s78
      %p87 = scmp.eq.s32.totalorder %s25, 0
      %p88 = por %p86, %p87
      %p89 = scmp.ne.s32.totalorder %s77, %s78
      %p90 = scmp.eq.s32.totalorder %s26, 7
      %p91 = por %p89, %p90
      %p93 = scmp.ne.s32.totalorder %s78, %s92
      %p94 = scmp.eq.s32.totalorder %s26, 0
      %p95 = por %p93, %p94
      %s97 = sadd.s32 %s96, 1
      %p100 = scmp.eq.s32.totalorder %s20, 7
      %p101 = scmp.ne.s32.totalorder %s96, %s98
      %p102 = scmp.eq.s32.totalorder %s20, 0
      %p103 = por %p101, %p102
      %p104 = scmp.ne.s32.totalorder %s96, %s98
      %p105 = scmp.eq.s32.totalorder %s25, 7
      %p106 = por %p104, %p105
      %p107 = scmp.ne.s32.totalorder %s98, %s99
      %p108 = scmp.eq.s32.totalorder %s25, 0
      %p109 = por %p107, %p108
      %p110 = scmp.ne.s32.totalorder %s98, %s99
      %p111 = scmp.eq.s32.totalorder %s26, 7
      %p112 = por %p110, %p111
      %p114 = scmp.ne.s32.totalorder %s99, %s113
      %p115 = scmp.eq.s32.totalorder %s26, 0
      %p116 = por %p114, %p115
      %s118 = sadd.s32 %s117, 1
      %p121 = scmp.eq.s32.totalorder %s20, 7
      %p122 = scmp.ne.s32.totalorder %s117, %s119
      %p123 = scmp.eq.s32.totalorder %s20, 0
      %p124 = por %p122, %p123
      %p125 = scmp.ne.s32.totalorder %s117, %s119
      %p126 = scmp.eq.s32.totalorder %s25, 7
      %p127 = por %p125, %p126
      %p128 = scmp.ne.s32.totalorder %s119, %s120
      %p129 = scmp.eq.s32.totalorder %s25, 0
      %p130 = por %p128, %p129
      %p131 = scmp.ne.s32.totalorder %s119, %s120
      %p132 = scmp.eq.s32.totalorder %s26, 7
      %p133 = por %p131, %p132
      %p135 = scmp.ne.s32.totalorder %s120, %s134
      %p136 = scmp.eq.s32.totalorder %s26, 0
      %p137 = por %p135, %p136
      %s139 = sadd.s32 %s138, 1
      %p142 = scmp.eq.s32.totalorder %s20, 7
      %p143 = scmp.ne.s32.totalorder %s138, %s140
      %p144 = scmp.eq.s32.totalorder %s20, 0
      %p145 = por %p143, %p144
      %p146 = scmp.ne.s32.totalorder %s138, %s140
      %p147 = scmp.eq.s32.totalorder %s25, 7
      %p148 = por %p146, %p147
      %p149 = scmp.ne.s32.totalorder %s140, %s141
      %p150 = scmp.eq.s32.totalorder %s25, 0
      %p151 = por %p149, %p150
      %p152 = scmp.ne.s32.totalorder %s140, %s141
      %p153 = scmp.eq.s32.totalorder %s26, 7
      %p154 = por %p152, %p153
      %p156 = scmp.ne.s32.totalorder %s141, %s155
      %p157 = scmp.eq.s32.totalorder %s26, 0
      %p158 = por %p156, %p157
      %s159 = ssub.s32 %s20, %s27
      %p160 = scmp.eq.s32.totalorder %s159, 0
      %s162 = sadd.s32 %s161, 1
      %s163 = scalar_select %p160, %s161, %s162
      %p166 = pneg %p160
      %p167 = scmp.eq.s32.totalorder %s20, 7
      %p168 = por %p166, %p167
      %p169 = scmp.ne.s32.totalorder %s161, %s164
      %p170 = scmp.eq.s32.totalorder %s20, 0
      %p171 = por %p169, %p170
      %p172 = scmp.ne.s32.totalorder %s161, %s164
      %p173 = scmp.eq.s32.totalorder %s25, 7
      %p174 = por %p172, %p173
      %p175 = scmp.ne.s32.totalorder %s164, %s165
      %p176 = scmp.eq.s32.totalorder %s25, 0
      %p177 = por %p175, %p176
      %p178 = scmp.ne.s32.totalorder %s164, %s165
      %p179 = scmp.eq.s32.totalorder %s26, 7
      %p180 = por %p178, %p179
      %p182 = scmp.ne.s32.totalorder %s165, %s181
      %p183 = scmp.eq.s32.totalorder %s26, 0
      %p184 = por %p182, %p183
      %p185 = scmp.le.s32.totalorder 1, %s20
      %p186 = scmp.lt.s32.totalorder %s20, 9
      %p187 = pnand %p185, %p186
      %p188 = pneg %p187
      // Predicated region
      $region9: #{tpu_custom_call.1} parent=5 // pred_check
        _
      $region10: #{tpu_custom_call.1} parent=5 // pred_check_branch
        %190 = sbr.rel (%p187) target = $region12
      $region11: #{tpu_custom_call.1} parent=5 // pred_region
        %s191 = ssub.s32 %s20, 1
        // Predicated region
        $region13: #{tpu_custom_call.1} parent=11 // pred_check
          %p192 = pneg %p67
        $region14: #{tpu_custom_call.1} parent=11 // pred_check_branch
          %194 = sbr.rel (%p192) target = $region16
        $region15: #{tpu_custom_call.1} parent=11 // pred_region
          %196 = vsyncadd [#allocation6], 0
          %s197 = sshll.u32 %s1, 4
          %s198 = int_to_ptr.hbm [resolvable:$true] %s197
          %s199 = sshll.u32 [#allocation5], 4
          %s200 = int_to_ptr.vmem [resolvable:$true] %s199
          %205 = dma.hbm_to_vmem [thread:$0]  %s198, 2048, %s200, [#allocation6], 128, 128, 8
        $region16: #{tpu_custom_call.1} parent=11 // pred_fallthru
          _
        // Predicated region
        $region17: #{tpu_custom_call.1} parent=11 // pred_check
          %p206 = pneg %p88
        $region18: #{tpu_custom_call.1} parent=11 // pred_check_branch
          %208 = sbr.rel (%p206) target = $region20
        $region19: #{tpu_custom_call.1} parent=11 // pred_region
          %210 = vsyncadd [#allocation6], 0
          %s211 = sshll.u32 %s2, 4
          %s212 = int_to_ptr.hbm [resolvable:$true] %s211
          %s213 = sshll.u32 [#allocation7], 4
          %s214 = int_to_ptr.vmem [resolvable:$true] %s213
          %219 = dma.hbm_to_vmem [thread:$0]  %s212, 4096, %s214, [#allocation6], 256, 256, 16
        $region20: #{tpu_custom_call.1} parent=11 // pred_fallthru
          _
        // Predicated region
        $region21: #{tpu_custom_call.1} parent=11 // pred_check
          %p220 = pneg %p109
        $region22: #{tpu_custom_call.1} parent=11 // pred_check_branch
          %222 = sbr.rel (%p220) target = $region24
        $region23: #{tpu_custom_call.1} parent=11 // pred_region
          %224 = vsyncadd [#allocation9], 0
          %s226 = sshll.u32 %s3, 4
          %s227 = int_to_ptr.hbm [resolvable:$true] %s226
          %s228 = sshll.u32 [#allocation8], 4
          %s229 = int_to_ptr.vmem [resolvable:$true] %s228
          %231 = dma.hbm_to_vmem [thread:$0]  %s227, 64, %s229, [#allocation9]
        $region24: #{tpu_custom_call.1} parent=11 // pred_fallthru
          _
        // Predicated region
        $region25: #{tpu_custom_call.1} parent=11 // pred_check
          %p232 = pneg %p130
        $region26: #{tpu_custom_call.1} parent=11 // pred_check_branch
          %234 = sbr.rel (%p232) target = $region28
        $region27: #{tpu_custom_call.1} parent=11 // pred_region
          %236 = vsyncadd [#allocation9], 0
          %s237 = sshll.u32 %s4, 4
          %s238 = int_to_ptr.hbm [resolvable:$true] %s237
          %s239 = sshll.u32 [#allocation10], 4
          %s240 = int_to_ptr.vmem [resolvable:$true] %s239
          %245 = dma.hbm_to_vmem [thread:$0]  %s238, 4096, %s240, [#allocation9], 64, 64, 4
        $region28: #{tpu_custom_call.1} parent=11 // pred_fallthru
          _
        // Predicated region
        $region29: #{tpu_custom_call.1} parent=11 // pred_check
          %p246 = pneg %p151
        $region30: #{tpu_custom_call.1} parent=11 // pred_check_branch
          %248 = sbr.rel (%p246) target = $region32
        $region31: #{tpu_custom_call.1} parent=11 // pred_region
          _
        $region32: #{tpu_custom_call.1} parent=11 // pred_fallthru
          _
      $region12: #{tpu_custom_call.1} parent=5 // pred_fallthru
        _
      %p249 = scmp.lt.s32.totalorder %s20, 8
      // Predicated region
      $region33: #{tpu_custom_call.1} parent=5 // pred_check
        %p250 = pneg %p249
      $region34: #{tpu_custom_call.1} parent=5 // pred_check_branch
        %252 = sbr.rel (%p250) target = $region36
      $region35: #{tpu_custom_call.1} parent=5 // pred_region
        // Predicated region
        $region37: #{tpu_custom_call.1} parent=35 // pred_check
          %p253 = pneg %p40
        $region38: #{tpu_custom_call.1} parent=35 // pred_check_branch
          %255 = sbr.rel (%p253) target = $region40
        $region39: #{tpu_custom_call.1} parent=35 // pred_region
          %s256 = sand.u32 %s30, 1
          %s257 = scalar_lea.sflag [#allocation3], %s256
          %s258 = sand.u32 %s30, 1
          %s259 = smul.addr %s258, 16
          %s260 = scalar_lea.vmem [#allocation2], %s259
          %s261 = smul.u32 2, %s20
          %263 = vsyncadd %s257, 0
          %s264 = smul.addr %s261, 8
          %s265 = scalar_lea.hbm %s0, %s264
          %s266 = sshll.u32 %s265, 4
          %s267 = int_to_ptr.hbm [resolvable:$true] %s266
          %s268 = sshll.u32 %s260, 4
          %s269 = int_to_ptr.vmem [resolvable:$true] %s268
          %274 = dma.hbm_to_vmem [thread:$0]  %s267, 256, %s269, %s257, 128, 128, 8
        $region40: #{tpu_custom_call.1} parent=35 // pred_fallthru
          _
      $region36: #{tpu_custom_call.1} parent=5 // pred_fallthru
        _
      %p275 = scmp.le.s32.totalorder 1, %s20
      %p276 = scmp.lt.s32.totalorder %s20, 9
      %p277 = pnand %p275, %p276
      %p278 = pneg %p277
      // Predicated region
      $region41: #{tpu_custom_call.1} parent=5 // pred_check
        _
      $region42: #{tpu_custom_call.1} parent=5 // pred_check_branch
        %280 = sbr.rel (%p277) target = $region44
      $region43: #{tpu_custom_call.1} parent=5 // pred_region
        %s281 = ssub.s32 %s20, 1
        %s282 = sand.u32 %s33, 1
        %s283 = scalar_lea.sflag [#allocation3], %s282
        %s284 = sand.u32 %s33, 1
        %s285 = smul.addr %s284, 16
        %s286 = scalar_lea.vmem [#allocation2], %s285
        // Predicated region
        $region45: #{tpu_custom_call.1} parent=43 // pred_check
          %p287 = pneg %p46
        $region46: #{tpu_custom_call.1} parent=43 // pred_check_branch
          %289 = sbr.rel (%p287) target = $region48
        $region47: #{tpu_custom_call.1} parent=43 // pred_region
          %291 = dma.done %s283, 256
        $region48: #{tpu_custom_call.1} parent=43 // pred_fallthru
          _
        // Predicated region
        $region49: #{tpu_custom_call.1} parent=43 // pred_check
          %p292 = pneg %p67
        $region50: #{tpu_custom_call.1} parent=43 // pred_check_branch
          %294 = sbr.rel (%p292) target = $region52
        $region51: #{tpu_custom_call.1} parent=43 // pred_region
          %296 = dma.done [#allocation6], 2048
        $region52: #{tpu_custom_call.1} parent=43 // pred_fallthru
          _
        // Predicated region
        $region53: #{tpu_custom_call.1} parent=43 // pred_check
          %p297 = pneg %p88
        $region54: #{tpu_custom_call.1} parent=43 // pred_check_branch
          %299 = sbr.rel (%p297) target = $region56
        $region55: #{tpu_custom_call.1} parent=43 // pred_region
          %301 = dma.done [#allocation6], 4096
        $region56: #{tpu_custom_call.1} parent=43 // pred_fallthru
          _
        // Predicated region
        $region57: #{tpu_custom_call.1} parent=43 // pred_check
          %p302 = pneg %p109
        $region58: #{tpu_custom_call.1} parent=43 // pred_check_branch
          %304 = sbr.rel (%p302) target = $region60
        $region59: #{tpu_custom_call.1} parent=43 // pred_region
          %306 = dma.done [#allocation9], 64
        $region60: #{tpu_custom_call.1} parent=43 // pred_fallthru
          _
        // Predicated region
        $region61: #{tpu_custom_call.1} parent=43 // pred_check
          %p307 = pneg %p130
        $region62: #{tpu_custom_call.1} parent=43 // pred_check_branch
          %309 = sbr.rel (%p307) target = $region64
        $region63: #{tpu_custom_call.1} parent=43 // pred_region
          %311 = dma.done [#allocation9], 4096
        $region64: #{tpu_custom_call.1} parent=43 // pred_fallthru
          _
        %s312 = sand.u32 %s33, 1
        %s313 = scalar_lea.sflag [#allocation3], %s312
        %s314 = sand.u32 %s33, 1
        %s315 = smul.addr %s314, 16
        %s316 = scalar_lea.vmem [#allocation2], %s315
        %p317 = pneg %p46
        %p318 = pneg %p43
        %p319 = pneg %p67
        %p320 = pneg %p64
        %p321 = pneg %p88
        %p322 = pneg %p85
        %p323 = pneg %p109
        %p324 = pneg %p106
        %p325 = pneg %p130
        %p326 = pneg %p127
        %p327 = pneg %p151
        %p328 = pneg %p148
        %p329 = pneg %p177
        %p330 = pneg %p174
        %s331 = sand.u32 %s164, 1
        %s332 = scalar_lea.sflag [#allocation4], %s331
        %s333 = sand.u32 %s164, 1
        %s334 = smul.addr %s333, 16
        %s335 = scalar_lea.vmem [#allocation11], %s334
        %s336 = smul.u32 2, %s25
        %s337 = smul.u32 2, %s25
        %v338 = vld [vmem:[%s286] sm:$0xff]
        %v339 = vld [vmem:[%s286 + $0x8] sm:$0xff]
        %v340 = vld [vmem:[#allocation5] sm:$0xff]
        %v341 = vld [vmem:[#allocation5 + $0x8] sm:$0xff]
        %v342 = vld [vmem:[#allocation5 + $0x10] sm:$0xff]
        %v343 = vld [vmem:[#allocation5 + $0x18] sm:$0xff]
        %v344 = vld [vmem:[#allocation5 + $0x20] sm:$0xff]
        %v345 = vld [vmem:[#allocation5 + $0x28] sm:$0xff]
        %v346 = vld [vmem:[#allocation5 + $0x30] sm:$0xff]
        %v347 = vld [vmem:[#allocation5 + $0x38] sm:$0xff]
        %v348 = vld [vmem:[#allocation5 + $0x40] sm:$0xff]
        %v349 = vld [vmem:[#allocation5 + $0x48] sm:$0xff]
        %v350 = vld [vmem:[#allocation5 + $0x50] sm:$0xff]
        %v351 = vld [vmem:[#allocation5 + $0x58] sm:$0xff]
        %v352 = vld [vmem:[#allocation5 + $0x60] sm:$0xff]
        %v353 = vld [vmem:[#allocation5 + $0x68] sm:$0xff]
        %v354 = vld [vmem:[#allocation5 + $0x70] sm:$0xff]
        %v355 = vld [vmem:[#allocation5 + $0x78] sm:$0xff]
        %v356 = vand.u32 %v355, 4294901760
        %357 = vmatpush.msra.mxu0 %v356
        %v358 = vand.u32 %v354, 4294901760
        %359 = vmatpush.msra.mxu0 %v358
        %v360 = vand.u32 %v353, 4294901760
        %361 = vmatpush.msra.mxu0 %v360
        %v362 = vand.u32 %v352, 4294901760
        %363 = vmatpush.msra.mxu0 %v362
        %v364 = vand.u32 %v351, 4294901760
        %365 = vmatpush.msra.mxu0 %v364
        %v366 = vand.u32 %v350, 4294901760
        %367 = vmatpush.msra.mxu0 %v366
        %v368 = vand.u32 %v349, 4294901760
        %369 = vmatpush.msra.mxu0 %v368
        %v370 = vand.u32 %v348, 4294901760
        %371 = vmatpush.msra.mxu0 %v370
        %v372 = vand.u32 %v347, 4294901760
        %373 = vmatpush.msra.mxu0 %v372
        %v374 = vand.u32 %v346, 4294901760
        %375 = vmatpush.msra.mxu0 %v374
        %v376 = vand.u32 %v345, 4294901760
        %377 = vmatpush.msra.mxu0 %v376
        %v378 = vand.u32 %v344, 4294901760
        %379 = vmatpush.msra.mxu0 %v378
        %v380 = vand.u32 %v343, 4294901760
        %381 = vmatpush.msra.mxu0 %v380
        %v382 = vand.u32 %v342, 4294901760
        %383 = vmatpush.msra.mxu0 %v382
        %v384 = vand.u32 %v341, 4294901760
        %385 = vmatpush.msra.mxu0 %v384
        %v386 = vand.u32 %v340, 4294901760
        %387 = vmatpush.msra.mxu0 %v386
        %v388 = vand.u32 %v338, 4294901760
        %v389 = vsub.f32 %v338, %v388
        %v390 = vand.u32 %v389, 4294901760
        %v391 = vsub.f32 %v389, %v390
        %v392 = vand.u32 %v391, 4294901760
        %393 = vmatmul.f32.gmra.mxu0 %v392
        %v394 = vpop.f32.mrf.mxu0
        %v395 = vadd.f32 0.0, %v394
        %v396 = vand.u32 %v339, 4294901760
        %v397 = vsub.f32 %v339, %v396
        %v398 = vand.u32 %v397, 4294901760
        %v399 = vsub.f32 %v397, %v398
        %v400 = vand.u32 %v399, 4294901760
        %401 = vmatmul.f32.gmra.mxu0 %v400
        %v402 = vpop.f32.mrf.mxu0
        %v403 = vadd.f32 0.0, %v402
        %404 = vdwg.mxu0
        %v405 = vand.u32 %v355, 4294901760
        %v406 = vsub.f32 %v355, %v405
        %v407 = vand.u32 %v406, 4294901760
        %v408 = vsub.f32 %v406, %v407
        %v409 = vand.u32 %v408, 4294901760
        %410 = vmatpush.msra.mxu0 %v409
        %v411 = vand.u32 %v354, 4294901760
        %v412 = vsub.f32 %v354, %v411
        %v413 = vand.u32 %v412, 4294901760
        %v414 = vsub.f32 %v412, %v413
        %v415 = vand.u32 %v414, 4294901760
        %416 = vmatpush.msra.mxu0 %v415
        %v417 = vand.u32 %v353, 4294901760
        %v418 = vsub.f32 %v353, %v417
        %v419 = vand.u32 %v418, 4294901760
        %v420 = vsub.f32 %v418, %v419
        %v421 = vand.u32 %v420, 4294901760
        %422 = vmatpush.msra.mxu0 %v421
        %v423 = vand.u32 %v352, 4294901760
        %v424 = vsub.f32 %v352, %v423
        %v425 = vand.u32 %v424, 4294901760
        %v426 = vsub.f32 %v424, %v425
        %v427 = vand.u32 %v426, 4294901760
        %428 = vmatpush.msra.mxu0 %v427
        %v429 = vand.u32 %v351, 4294901760
        %v430 = vsub.f32 %v351, %v429
        %v431 = vand.u32 %v430, 4294901760
        %v432 = vsub.f32 %v430, %v431
        %v433 = vand.u32 %v432, 4294901760
        %434 = vmatpush.msra.mxu0 %v433
        %v435 = vand.u32 %v350, 4294901760
        %v436 = vsub.f32 %v350, %v435
        %v437 = vand.u32 %v436, 4294901760
        %v438 = vsub.f32 %v436, %v437
        %v439 = vand.u32 %v438, 4294901760
        %440 = vmatpush.msra.mxu0 %v439
        %v441 = vand.u32 %v349, 4294901760
        %v442 = vsub.f32 %v349, %v441
        %v443 = vand.u32 %v442, 4294901760
        %v444 = vsub.f32 %v442, %v443
        %v445 = vand.u32 %v444, 4294901760
        %446 = vmatpush.msra.mxu0 %v445
        %v447 = vand.u32 %v348, 4294901760
        %v448 = vsub.f32 %v348, %v447
        %v449 = vand.u32 %v448, 4294901760
        %v450 = vsub.f32 %v448, %v449
        %v451 = vand.u32 %v450, 4294901760
        %452 = vmatpush.msra.mxu0 %v451
        %v453 = vand.u32 %v347, 4294901760
        %v454 = vsub.f32 %v347, %v453
        %v455 = vand.u32 %v454, 4294901760
        %v456 = vsub.f32 %v454, %v455
        %v457 = vand.u32 %v456, 4294901760
        %458 = vmatpush.msra.mxu0 %v457
        %v459 = vand.u32 %v346, 4294901760
        %v460 = vsub.f32 %v346, %v459
        %v461 = vand.u32 %v460, 4294901760
        %v462 = vsub.f32 %v460, %v461
        %v463 = vand.u32 %v462, 4294901760
        %464 = vmatpush.msra.mxu0 %v463
        %v465 = vand.u32 %v345, 4294901760
        %v466 = vsub.f32 %v345, %v465
        %v467 = vand.u32 %v466, 4294901760
        %v468 = vsub.f32 %v466, %v467
        %v469 = vand.u32 %v468, 4294901760
        %470 = vmatpush.msra.mxu0 %v469
        %v471 = vand.u32 %v344, 4294901760
        %v472 = vsub.f32 %v344, %v471
        %v473 = vand.u32 %v472, 4294901760
        %v474 = vsub.f32 %v472, %v473
        %v475 = vand.u32 %v474, 4294901760
        %476 = vmatpush.msra.mxu0 %v475
        %v477 = vand.u32 %v343, 4294901760
        %v478 = vsub.f32 %v343, %v477
        %v479 = vand.u32 %v478, 4294901760
        %v480 = vsub.f32 %v478, %v479
        %v481 = vand.u32 %v480, 4294901760
        %482 = vmatpush.msra.mxu0 %v481
        %v483 = vand.u32 %v342, 4294901760
        %v484 = vsub.f32 %v342, %v483
        %v485 = vand.u32 %v484, 4294901760
        %v486 = vsub.f32 %v484, %v485
        %v487 = vand.u32 %v486, 4294901760
        %488 = vmatpush.msra.mxu0 %v487
        %v489 = vand.u32 %v341, 4294901760
        %v490 = vsub.f32 %v341, %v489
        %v491 = vand.u32 %v490, 4294901760
        %v492 = vsub.f32 %v490, %v491
        %v493 = vand.u32 %v492, 4294901760
        %494 = vmatpush.msra.mxu0 %v493
        %v495 = vand.u32 %v340, 4294901760
        %v496 = vsub.f32 %v340, %v495
        %v497 = vand.u32 %v496, 4294901760
        %v498 = vsub.f32 %v496, %v497
        %v499 = vand.u32 %v498, 4294901760
        %500 = vmatpush.msra.mxu0 %v499
        %v501 = vand.u32 %v338, 4294901760
        %502 = vmatmul.f32.gmra.mxu0 %v501
        %v503 = vpop.f32.mrf.mxu0
        %v504 = vadd.f32 %v395, %v503
        %v505 = vand.u32 %v339, 4294901760
        %506 = vmatmul.f32.gmra.mxu0 %v505
        %v507 = vpop.f32.mrf.mxu0
        %v508 = vadd.f32 %v403, %v507
        %509 = vdwg.mxu0
        %v510 = vand.u32 %v355, 4294901760
        %v511 = vsub.f32 %v355, %v510
        %512 = vmatpush.msra.mxu0 %v511
        %v513 = vand.u32 %v354, 4294901760
        %v514 = vsub.f32 %v354, %v513
        %515 = vmatpush.msra.mxu0 %v514
        %v516 = vand.u32 %v353, 4294901760
        %v517 = vsub.f32 %v353, %v516
        %518 = vmatpush.msra.mxu0 %v517
        %v519 = vand.u32 %v352, 4294901760
        %v520 = vsub.f32 %v352, %v519
        %521 = vmatpush.msra.mxu0 %v520
        %v522 = vand.u32 %v351, 4294901760
        %v523 = vsub.f32 %v351, %v522
        %524 = vmatpush.msra.mxu0 %v523
        %v525 = vand.u32 %v350, 4294901760
        %v526 = vsub.f32 %v350, %v525
        %527 = vmatpush.msra.mxu0 %v526
        %v528 = vand.u32 %v349, 4294901760
        %v529 = vsub.f32 %v349, %v528
        %530 = vmatpush.msra.mxu0 %v529
        %v531 = vand.u32 %v348, 4294901760
        %v532 = vsub.f32 %v348, %v531
        %533 = vmatpush.msra.mxu0 %v532
        %v534 = vand.u32 %v347, 4294901760
        %v535 = vsub.f32 %v347, %v534
        %536 = vmatpush.msra.mxu0 %v535
        %v537 = vand.u32 %v346, 4294901760
        %v538 = vsub.f32 %v346, %v537
        %539 = vmatpush.msra.mxu0 %v538
        %v540 = vand.u32 %v345, 4294901760
        %v541 = vsub.f32 %v345, %v540
        %542 = vmatpush.msra.mxu0 %v541
        %v543 = vand.u32 %v344, 4294901760
        %v544 = vsub.f32 %v344, %v543
        %545 = vmatpush.msra.mxu0 %v544
        %v546 = vand.u32 %v343, 4294901760
        %v547 = vsub.f32 %v343, %v546
        %548 = vmatpush.msra.mxu0 %v547
        %v549 = vand.u32 %v342, 4294901760
        %v550 = vsub.f32 %v342, %v549
        %551 = vmatpush.msra.mxu0 %v550
        %v552 = vand.u32 %v341, 4294901760
        %v553 = vsub.f32 %v341, %v552
        %554 = vmatpush.msra.mxu0 %v553
        %v555 = vand.u32 %v340, 4294901760
        %v556 = vsub.f32 %v340, %v555
        %557 = vmatpush.msra.mxu0 %v556
        %v558 = vand.u32 %v338, 4294901760
        %v559 = vsub.f32 %v338, %v558
        %560 = vmatmul.f32.gmra.mxu0 %v559
        %v561 = vpop.f32.mrf.mxu0
        %v562 = vadd.f32 %v504, %v561
        %v563 = vand.u32 %v339, 4294901760
        %v564 = vsub.f32 %v339, %v563
        %565 = vmatmul.f32.gmra.mxu0 %v564
        %v566 = vpop.f32.mrf.mxu0
        %v567 = vadd.f32 %v508, %v566
        %568 = vdwg.mxu0
        %v569 = vand.u32 %v355, 4294901760
        %570 = vmatpush.msra.mxu0 %v569
        %v571 = vand.u32 %v354, 4294901760
        %572 = vmatpush.msra.mxu0 %v571
        %v573 = vand.u32 %v353, 4294901760
        %574 = vmatpush.msra.mxu0 %v573
        %v575 = vand.u32 %v352, 4294901760
        %576 = vmatpush.msra.mxu0 %v575
        %v577 = vand.u32 %v351, 4294901760
        %578 = vmatpush.msra.mxu0 %v577
        %v579 = vand.u32 %v350, 4294901760
        %580 = vmatpush.msra.mxu0 %v579
        %v581 = vand.u32 %v349, 4294901760
        %582 = vmatpush.msra.mxu0 %v581
        %v583 = vand.u32 %v348, 4294901760
        %584 = vmatpush.msra.mxu0 %v583
        %v585 = vand.u32 %v347, 4294901760
        %586 = vmatpush.msra.mxu0 %v585
        %v587 = vand.u32 %v346, 4294901760
        %588 = vmatpush.msra.mxu0 %v587
        %v589 = vand.u32 %v345, 4294901760
        %590 = vmatpush.msra.mxu0 %v589
        %v591 = vand.u32 %v344, 4294901760
        %592 = vmatpush.msra.mxu0 %v591
        %v593 = vand.u32 %v343, 4294901760
        %594 = vmatpush.msra.mxu0 %v593
        %v595 = vand.u32 %v342, 4294901760
        %596 = vmatpush.msra.mxu0 %v595
        %v597 = vand.u32 %v341, 4294901760
        %598 = vmatpush.msra.mxu0 %v597
        %v599 = vand.u32 %v340, 4294901760
        %600 = vmatpush.msra.mxu0 %v599
        %v601 = vand.u32 %v338, 4294901760
        %v602 = vsub.f32 %v338, %v601
        %v603 = vand.u32 %v602, 4294901760
        %604 = vmatmul.f32.gmra.mxu0 %v603
        %v605 = vpop.f32.mrf.mxu0
        %v606 = vadd.f32 %v562, %v605
        %v607 = vand.u32 %v339, 4294901760
        %v608 = vsub.f32 %v339, %v607
        %v609 = vand.u32 %v608, 4294901760
        %610 = vmatmul.f32.gmra.mxu0 %v609
        %v611 = vpop.f32.mrf.mxu0
        %v612 = vadd.f32 %v567, %v611
        %613 = vdwg.mxu0
        %v614 = vand.u32 %v355, 4294901760
        %v615 = vsub.f32 %v355, %v614
        %v616 = vand.u32 %v615, 4294901760
        %617 = vmatpush.msra.mxu0 %v616
        %v618 = vand.u32 %v354, 4294901760
        %v619 = vsub.f32 %v354, %v618
        %v620 = vand.u32 %v619, 4294901760
        %621 = vmatpush.msra.mxu0 %v620
        %v622 = vand.u32 %v353, 4294901760
        %v623 = vsub.f32 %v353, %v622
        %v624 = vand.u32 %v623, 4294901760
        %625 = vmatpush.msra.mxu0 %v624
        %v626 = vand.u32 %v352, 4294901760
        %v627 = vsub.f32 %v352, %v626
        %v628 = vand.u32 %v627, 4294901760
        %629 = vmatpush.msra.mxu0 %v628
        %v630 = vand.u32 %v351, 4294901760
        %v631 = vsub.f32 %v351, %v630
        %v632 = vand.u32 %v631, 4294901760
        %633 = vmatpush.msra.mxu0 %v632
        %v634 = vand.u32 %v350, 4294901760
        %v635 = vsub.f32 %v350, %v634
        %v636 = vand.u32 %v635, 4294901760
        %637 = vmatpush.msra.mxu0 %v636
        %v638 = vand.u32 %v349, 4294901760
        %v639 = vsub.f32 %v349, %v638
        %v640 = vand.u32 %v639, 4294901760
        %641 = vmatpush.msra.mxu0 %v640
        %v642 = vand.u32 %v348, 4294901760
        %v643 = vsub.f32 %v348, %v642
        %v644 = vand.u32 %v643, 4294901760
        %645 = vmatpush.msra.mxu0 %v644
        %v646 = vand.u32 %v347, 4294901760
        %v647 = vsub.f32 %v347, %v646
        %v648 = vand.u32 %v647, 4294901760
        %649 = vmatpush.msra.mxu0 %v648
        %v650 = vand.u32 %v346, 4294901760
        %v651 = vsub.f32 %v346, %v650
        %v652 = vand.u32 %v651, 4294901760
        %653 = vmatpush.msra.mxu0 %v652
        %v654 = vand.u32 %v345, 4294901760
        %v655 = vsub.f32 %v345, %v654
        %v656 = vand.u32 %v655, 4294901760
        %657 = vmatpush.msra.mxu0 %v656
        %v658 = vand.u32 %v344, 4294901760
        %v659 = vsub.f32 %v344, %v658
        %v660 = vand.u32 %v659, 4294901760
        %661 = vmatpush.msra.mxu0 %v660
        %v662 = vand.u32 %v343, 4294901760
        %v663 = vsub.f32 %v343, %v662
        %v664 = vand.u32 %v663, 4294901760
        %665 = vmatpush.msra.mxu0 %v664
        %v666 = vand.u32 %v342, 4294901760
        %v667 = vsub.f32 %v342, %v666
        %v668 = vand.u32 %v667, 4294901760
        %669 = vmatpush.msra.mxu0 %v668
        %v670 = vand.u32 %v341, 4294901760
        %v671 = vsub.f32 %v341, %v670
        %v672 = vand.u32 %v671, 4294901760
        %673 = vmatpush.msra.mxu0 %v672
        %v674 = vand.u32 %v340, 4294901760
        %v675 = vsub.f32 %v340, %v674
        %v676 = vand.u32 %v675, 4294901760
        %677 = vmatpush.msra.mxu0 %v676
        %v678 = vand.u32 %v338, 4294901760
        %679 = vmatmul.f32.gmra.mxu0 %v678
        %v680 = vpop.f32.mrf.mxu0
        %v681 = vadd.f32 %v606, %v680
        %v682 = vand.u32 %v339, 4294901760
        %683 = vmatmul.f32.gmra.mxu0 %v682
        %v684 = vpop.f32.mrf.mxu0
        %v685 = vadd.f32 %v612, %v684
        %686 = vdwg.mxu0
        %v687 = vand.u32 %v355, 4294901760
        %688 = vmatpush.msra.mxu0 %v687
        %v689 = vand.u32 %v354, 4294901760
        %690 = vmatpush.msra.mxu0 %v689
        %v691 = vand.u32 %v353, 4294901760
        %692 = vmatpush.msra.mxu0 %v691
        %v693 = vand.u32 %v352, 4294901760
        %694 = vmatpush.msra.mxu0 %v693
        %v695 = vand.u32 %v351, 4294901760
        %696 = vmatpush.msra.mxu0 %v695
        %v697 = vand.u32 %v350, 4294901760
        %698 = vmatpush.msra.mxu0 %v697
        %v699 = vand.u32 %v349, 4294901760
        %700 = vmatpush.msra.mxu0 %v699
        %v701 = vand.u32 %v348, 4294901760
        %702 = vmatpush.msra.mxu0 %v701
        %v703 = vand.u32 %v347, 4294901760
        %704 = vmatpush.msra.mxu0 %v703
        %v705 = vand.u32 %v346, 4294901760
        %706 = vmatpush.msra.mxu0 %v705
        %v707 = vand.u32 %v345, 4294901760
        %708 = vmatpush.msra.mxu0 %v707
        %v709 = vand.u32 %v344, 4294901760
        %710 = vmatpush.msra.mxu0 %v709
        %v711 = vand.u32 %v343, 4294901760
        %712 = vmatpush.msra.mxu0 %v711
        %v713 = vand.u32 %v342, 4294901760
        %714 = vmatpush.msra.mxu0 %v713
        %v715 = vand.u32 %v341, 4294901760
        %716 = vmatpush.msra.mxu0 %v715
        %v717 = vand.u32 %v340, 4294901760
        %718 = vmatpush.msra.mxu0 %v717
        %v719 = vand.u32 %v338, 4294901760
        %720 = vmatmul.f32.gmra.mxu0 %v719
        %v721 = vpop.f32.mrf.mxu0
        %v722 = vadd.f32 %v681, %v721
        %v723 = vand.u32 %v339, 4294901760
        %724 = vmatmul.f32.gmra.mxu0 %v723
        %v725 = vpop.f32.mrf.mxu0
        %v726 = vadd.f32 %v685, %v725
        %727 = vdwg.mxu0
        %v728 = vmul.f32 %v338, %v338
        %v729 = vmul.f32 %v339, %v339
        %v730 = vand.u32 %v355, 4294901760
        %731 = vmatpush.msra.mxu0 %v730
        %v732 = vand.u32 %v354, 4294901760
        %733 = vmatpush.msra.mxu0 %v732
        %v734 = vand.u32 %v353, 4294901760
        %735 = vmatpush.msra.mxu0 %v734
        %v736 = vand.u32 %v352, 4294901760
        %737 = vmatpush.msra.mxu0 %v736
        %v738 = vand.u32 %v351, 4294901760
        %739 = vmatpush.msra.mxu0 %v738
        %v740 = vand.u32 %v350, 4294901760
        %741 = vmatpush.msra.mxu0 %v740
        %v742 = vand.u32 %v349, 4294901760
        %743 = vmatpush.msra.mxu0 %v742
        %v744 = vand.u32 %v348, 4294901760
        %745 = vmatpush.msra.mxu0 %v744
        %v746 = vand.u32 %v347, 4294901760
        %747 = vmatpush.msra.mxu0 %v746
        %v748 = vand.u32 %v346, 4294901760
        %749 = vmatpush.msra.mxu0 %v748
        %v750 = vand.u32 %v345, 4294901760
        %751 = vmatpush.msra.mxu0 %v750
        %v752 = vand.u32 %v344, 4294901760
        %753 = vmatpush.msra.mxu0 %v752
        %v754 = vand.u32 %v343, 4294901760
        %755 = vmatpush.msra.mxu0 %v754
        %v756 = vand.u32 %v342, 4294901760
        %757 = vmatpush.msra.mxu0 %v756
        %v758 = vand.u32 %v341, 4294901760
        %759 = vmatpush.msra.mxu0 %v758
        %v760 = vand.u32 %v340, 4294901760
        %761 = vmatpush.msra.mxu0 %v760
        %v762 = vand.u32 %v728, 4294901760
        %v763 = vsub.f32 %v728, %v762
        %v764 = vand.u32 %v763, 4294901760
        %v765 = vsub.f32 %v763, %v764
        %v766 = vand.u32 %v765, 4294901760
        %767 = vmatmul.f32.gmra.mxu0 %v766
        %v768 = vpop.f32.mrf.mxu0
        %v769 = vadd.f32 0.0, %v768
        %v770 = vand.u32 %v729, 4294901760
        %v771 = vsub.f32 %v729, %v770
        %v772 = vand.u32 %v771, 4294901760
        %v773 = vsub.f32 %v771, %v772
        %v774 = vand.u32 %v773, 4294901760
        %775 = vmatmul.f32.gmra.mxu0 %v774
        %v776 = vpop.f32.mrf.mxu0
        %v777 = vadd.f32 0.0, %v776
        %778 = vdwg.mxu0
        %v779 = vand.u32 %v355, 4294901760
        %v780 = vsub.f32 %v355, %v779
        %v781 = vand.u32 %v780, 4294901760
        %v782 = vsub.f32 %v780, %v781
        %v783 = vand.u32 %v782, 4294901760
        %784 = vmatpush.msra.mxu0 %v783
        %v785 = vand.u32 %v354, 4294901760
        %v786 = vsub.f32 %v354, %v785
        %v787 = vand.u32 %v786, 4294901760
        %v788 = vsub.f32 %v786, %v787
        %v789 = vand.u32 %v788, 4294901760
        %790 = vmatpush.msra.mxu0 %v789
        %v791 = vand.u32 %v353, 4294901760
        %v792 = vsub.f32 %v353, %v791
        %v793 = vand.u32 %v792, 4294901760
        %v794 = vsub.f32 %v792, %v793
        %v795 = vand.u32 %v794, 4294901760
        %796 = vmatpush.msra.mxu0 %v795
        %v797 = vand.u32 %v352, 4294901760
        %v798 = vsub.f32 %v352, %v797
        %v799 = vand.u32 %v798, 4294901760
        %v800 = vsub.f32 %v798, %v799
        %v801 = vand.u32 %v800, 4294901760
        %802 = vmatpush.msra.mxu0 %v801
        %v803 = vand.u32 %v351, 4294901760
        %v804 = vsub.f32 %v351, %v803
        %v805 = vand.u32 %v804, 4294901760
        %v806 = vsub.f32 %v804, %v805
        %v807 = vand.u32 %v806, 4294901760
        %808 = vmatpush.msra.mxu0 %v807
        %v809 = vand.u32 %v350, 4294901760
        %v810 = vsub.f32 %v350, %v809
        %v811 = vand.u32 %v810, 4294901760
        %v812 = vsub.f32 %v810, %v811
        %v813 = vand.u32 %v812, 4294901760
        %814 = vmatpush.msra.mxu0 %v813
        %v815 = vand.u32 %v349, 4294901760
        %v816 = vsub.f32 %v349, %v815
        %v817 = vand.u32 %v816, 4294901760
        %v818 = vsub.f32 %v816, %v817
        %v819 = vand.u32 %v818, 4294901760
        %820 = vmatpush.msra.mxu0 %v819
        %v821 = vand.u32 %v348, 4294901760
        %v822 = vsub.f32 %v348, %v821
        %v823 = vand.u32 %v822, 4294901760
        %v824 = vsub.f32 %v822, %v823
        %v825 = vand.u32 %v824, 4294901760
        %826 = vmatpush.msra.mxu0 %v825
        %v827 = vand.u32 %v347, 4294901760
        %v828 = vsub.f32 %v347, %v827
        %v829 = vand.u32 %v828, 4294901760
        %v830 = vsub.f32 %v828, %v829
        %v831 = vand.u32 %v830, 4294901760
        %832 = vmatpush.msra.mxu0 %v831
        %v833 = vand.u32 %v346, 4294901760
        %v834 = vsub.f32 %v346, %v833
        %v835 = vand.u32 %v834, 4294901760
        %v836 = vsub.f32 %v834, %v835
        %v837 = vand.u32 %v836, 4294901760
        %838 = vmatpush.msra.mxu0 %v837
        %v839 = vand.u32 %v345, 4294901760
        %v840 = vsub.f32 %v345, %v839
        %v841 = vand.u32 %v840, 4294901760
        %v842 = vsub.f32 %v840, %v841
        %v843 = vand.u32 %v842, 4294901760
        %844 = vmatpush.msra.mxu0 %v843
        %v845 = vand.u32 %v344, 4294901760
        %v846 = vsub.f32 %v344, %v845
        %v847 = vand.u32 %v846, 4294901760
        %v848 = vsub.f32 %v846, %v847
        %v849 = vand.u32 %v848, 4294901760
        %850 = vmatpush.msra.mxu0 %v849
        %v851 = vand.u32 %v343, 4294901760
        %v852 = vsub.f32 %v343, %v851
        %v853 = vand.u32 %v852, 4294901760
        %v854 = vsub.f32 %v852, %v853
        %v855 = vand.u32 %v854, 4294901760
        %856 = vmatpush.msra.mxu0 %v855
        %v857 = vand.u32 %v342, 4294901760
        %v858 = vsub.f32 %v342, %v857
        %v859 = vand.u32 %v858, 4294901760
        %v860 = vsub.f32 %v858, %v859
        %v861 = vand.u32 %v860, 4294901760
        %862 = vmatpush.msra.mxu0 %v861
        %v863 = vand.u32 %v341, 4294901760
        %v864 = vsub.f32 %v341, %v863
        %v865 = vand.u32 %v864, 4294901760
        %v866 = vsub.f32 %v864, %v865
        %v867 = vand.u32 %v866, 4294901760
        %868 = vmatpush.msra.mxu0 %v867
        %v869 = vand.u32 %v340, 4294901760
        %v870 = vsub.f32 %v340, %v869
        %v871 = vand.u32 %v870, 4294901760
        %v872 = vsub.f32 %v870, %v871
        %v873 = vand.u32 %v872, 4294901760
        %874 = vmatpush.msra.mxu0 %v873
        %v875 = vand.u32 %v728, 4294901760
        %876 = vmatmul.f32.gmra.mxu0 %v875
        %v877 = vpop.f32.mrf.mxu0
        %v878 = vadd.f32 %v769, %v877
        %v879 = vand.u32 %v729, 4294901760
        %880 = vmatmul.f32.gmra.mxu0 %v879
        %v881 = vpop.f32.mrf.mxu0
        %v882 = vadd.f32 %v777, %v881
        %883 = vdwg.mxu0
        %v884 = vand.u32 %v355, 4294901760
        %v885 = vsub.f32 %v355, %v884
        %886 = vmatpush.msra.mxu0 %v885
        %v887 = vand.u32 %v354, 4294901760
        %v888 = vsub.f32 %v354, %v887
        %889 = vmatpush.msra.mxu0 %v888
        %v890 = vand.u32 %v353, 4294901760
        %v891 = vsub.f32 %v353, %v890
        %892 = vmatpush.msra.mxu0 %v891
        %v893 = vand.u32 %v352, 4294901760
        %v894 = vsub.f32 %v352, %v893
        %895 = vmatpush.msra.mxu0 %v894
        %v896 = vand.u32 %v351, 4294901760
        %v897 = vsub.f32 %v351, %v896
        %898 = vmatpush.msra.mxu0 %v897
        %v899 = vand.u32 %v350, 4294901760
        %v900 = vsub.f32 %v350, %v899
        %901 = vmatpush.msra.mxu0 %v900
        %v902 = vand.u32 %v349, 4294901760
        %v903 = vsub.f32 %v349, %v902
        %904 = vmatpush.msra.mxu0 %v903
        %v905 = vand.u32 %v348, 4294901760
        %v906 = vsub.f32 %v348, %v905
        %907 = vmatpush.msra.mxu0 %v906
        %v908 = vand.u32 %v347, 4294901760
        %v909 = vsub.f32 %v347, %v908
        %910 = vmatpush.msra.mxu0 %v909
        %v911 = vand.u32 %v346, 4294901760
        %v912 = vsub.f32 %v346, %v911
        %913 = vmatpush.msra.mxu0 %v912
        %v914 = vand.u32 %v345, 4294901760
        %v915 = vsub.f32 %v345, %v914
        %916 = vmatpush.msra.mxu0 %v915
        %v917 = vand.u32 %v344, 4294901760
        %v918 = vsub.f32 %v344, %v917
        %919 = vmatpush.msra.mxu0 %v918
        %v920 = vand.u32 %v343, 4294901760
        %v921 = vsub.f32 %v343, %v920
        %922 = vmatpush.msra.mxu0 %v921
        %v923 = vand.u32 %v342, 4294901760
        %v924 = vsub.f32 %v342, %v923
        %925 = vmatpush.msra.mxu0 %v924
        %v926 = vand.u32 %v341, 4294901760
        %v927 = vsub.f32 %v341, %v926
        %928 = vmatpush.msra.mxu0 %v927
        %v929 = vand.u32 %v340, 4294901760
        %v930 = vsub.f32 %v340, %v929
        %931 = vmatpush.msra.mxu0 %v930
        %v932 = vand.u32 %v728, 4294901760
        %v933 = vsub.f32 %v728, %v932
        %934 = vmatmul.f32.gmra.mxu0 %v933
        %v935 = vpop.f32.mrf.mxu0
        %v936 = vadd.f32 %v878, %v935
        %v937 = vand.u32 %v729, 4294901760
        %v938 = vsub.f32 %v729, %v937
        %939 = vmatmul.f32.gmra.mxu0 %v938
        %v940 = vpop.f32.mrf.mxu0
        %v941 = vadd.f32 %v882, %v940
        %942 = vdwg.mxu0
        %v943 = vand.u32 %v355, 4294901760
        %944 = vmatpush.msra.mxu0 %v943
        %v945 = vand.u32 %v354, 4294901760
        %946 = vmatpush.msra.mxu0 %v945
        %v947 = vand.u32 %v353, 4294901760
        %948 = vmatpush.msra.mxu0 %v947
        %v949 = vand.u32 %v352, 4294901760
        %950 = vmatpush.msra.mxu0 %v949
        %v951 = vand.u32 %v351, 4294901760
        %952 = vmatpush.msra.mxu0 %v951
        %v953 = vand.u32 %v350, 4294901760
        %954 = vmatpush.msra.mxu0 %v953
        %v955 = vand.u32 %v349, 4294901760
        %956 = vmatpush.msra.mxu0 %v955
        %v957 = vand.u32 %v348, 4294901760
        %958 = vmatpush.msra.mxu0 %v957
        %v959 = vand.u32 %v347, 4294901760
        %960 = vmatpush.msra.mxu0 %v959
        %v961 = vand.u32 %v346, 4294901760
        %962 = vmatpush.msra.mxu0 %v961
        %v963 = vand.u32 %v345, 4294901760
        %964 = vmatpush.msra.mxu0 %v963
        %v965 = vand.u32 %v344, 4294901760
        %966 = vmatpush.msra.mxu0 %v965
        %v967 = vand.u32 %v343, 4294901760
        %968 = vmatpush.msra.mxu0 %v967
        %v969 = vand.u32 %v342, 4294901760
        %970 = vmatpush.msra.mxu0 %v969
        %v971 = vand.u32 %v341, 4294901760
        %972 = vmatpush.msra.mxu0 %v971
        %v973 = vand.u32 %v340, 4294901760
        %974 = vmatpush.msra.mxu0 %v973
        %v975 = vand.u32 %v728, 4294901760
        %v976 = vsub.f32 %v728, %v975
        %v977 = vand.u32 %v976, 4294901760
        %978 = vmatmul.f32.gmra.mxu0 %v977
        %v979 = vpop.f32.mrf.mxu0
        %v980 = vadd.f32 %v936, %v979
        %v981 = vand.u32 %v729, 4294901760
        %v982 = vsub.f32 %v729, %v981
        %v983 = vand.u32 %v982, 4294901760
        %984 = vmatmul.f32.gmra.mxu0 %v983
        %v985 = vpop.f32.mrf.mxu0
        %v986 = vadd.f32 %v941, %v985
        %987 = vdwg.mxu0
        %v988 = vand.u32 %v355, 4294901760
        %v989 = vsub.f32 %v355, %v988
        %v990 = vand.u32 %v989, 4294901760
        %991 = vmatpush.msra.mxu0 %v990
        %v992 = vand.u32 %v354, 4294901760
        %v993 = vsub.f32 %v354, %v992
        %v994 = vand.u32 %v993, 4294901760
        %995 = vmatpush.msra.mxu0 %v994
        %v996 = vand.u32 %v353, 4294901760
        %v997 = vsub.f32 %v353, %v996
        %v998 = vand.u32 %v997, 4294901760
        %999 = vmatpush.msra.mxu0 %v998
        %v1000 = vand.u32 %v352, 4294901760
        %v1001 = vsub.f32 %v352, %v1000
        %v1002 = vand.u32 %v1001, 4294901760
        %1003 = vmatpush.msra.mxu0 %v1002
        %v1004 = vand.u32 %v351, 4294901760
        %v1005 = vsub.f32 %v351, %v1004
        %v1006 = vand.u32 %v1005, 4294901760
        %1007 = vmatpush.msra.mxu0 %v1006
        %v1008 = vand.u32 %v350, 4294901760
        %v1009 = vsub.f32 %v350, %v1008
        %v1010 = vand.u32 %v1009, 4294901760
        %1011 = vmatpush.msra.mxu0 %v1010
        %v1012 = vand.u32 %v349, 4294901760
        %v1013 = vsub.f32 %v349, %v1012
        %v1014 = vand.u32 %v1013, 4294901760
        %1015 = vmatpush.msra.mxu0 %v1014
        %v1016 = vand.u32 %v348, 4294901760
        %v1017 = vsub.f32 %v348, %v1016
        %v1018 = vand.u32 %v1017, 4294901760
        %1019 = vmatpush.msra.mxu0 %v1018
        %v1020 = vand.u32 %v347, 4294901760
        %v1021 = vsub.f32 %v347, %v1020
        %v1022 = vand.u32 %v1021, 4294901760
        %1023 = vmatpush.msra.mxu0 %v1022
        %v1024 = vand.u32 %v346, 4294901760
        %v1025 = vsub.f32 %v346, %v1024
        %v1026 = vand.u32 %v1025, 4294901760
        %1027 = vmatpush.msra.mxu0 %v1026
        %v1028 = vand.u32 %v345, 4294901760
        %v1029 = vsub.f32 %v345, %v1028
        %v1030 = vand.u32 %v1029, 4294901760
        %1031 = vmatpush.msra.mxu0 %v1030
        %v1032 = vand.u32 %v344, 4294901760
        %v1033 = vsub.f32 %v344, %v1032
        %v1034 = vand.u32 %v1033, 4294901760
        %1035 = vmatpush.msra.mxu0 %v1034
        %v1036 = vand.u32 %v343, 4294901760
        %v1037 = vsub.f32 %v343, %v1036
        %v1038 = vand.u32 %v1037, 4294901760
        %1039 = vmatpush.msra.mxu0 %v1038
        %v1040 = vand.u32 %v342, 4294901760
        %v1041 = vsub.f32 %v342, %v1040
        %v1042 = vand.u32 %v1041, 4294901760
        %1043 = vmatpush.msra.mxu0 %v1042
        %v1044 = vand.u32 %v341, 4294901760
        %v1045 = vsub.f32 %v341, %v1044
        %v1046 = vand.u32 %v1045, 4294901760
        %1047 = vmatpush.msra.mxu0 %v1046
        %v1048 = vand.u32 %v340, 4294901760
        %v1049 = vsub.f32 %v340, %v1048
        %v1050 = vand.u32 %v1049, 4294901760
        %1051 = vmatpush.msra.mxu0 %v1050
        %v1052 = vand.u32 %v728, 4294901760
        %1053 = vmatmul.f32.gmra.mxu0 %v1052
        %v1054 = vpop.f32.mrf.mxu0
        %v1055 = vadd.f32 %v980, %v1054
        %v1056 = vand.u32 %v729, 4294901760
        %1057 = vmatmul.f32.gmra.mxu0 %v1056
        %v1058 = vpop.f32.mrf.mxu0
        %v1059 = vadd.f32 %v986, %v1058
        %1060 = vdwg.mxu0
        %v1061 = vand.u32 %v355, 4294901760
        %1062 = vmatpush.msra.mxu0 %v1061
        %v1063 = vand.u32 %v354, 4294901760
        %1064 = vmatpush.msra.mxu0 %v1063
        %v1065 = vand.u32 %v353, 4294901760
        %1066 = vmatpush.msra.mxu0 %v1065
        %v1067 = vand.u32 %v352, 4294901760
        %1068 = vmatpush.msra.mxu0 %v1067
        %v1069 = vand.u32 %v351, 4294901760
        %1070 = vmatpush.msra.mxu0 %v1069
        %v1071 = vand.u32 %v350, 4294901760
        %1072 = vmatpush.msra.mxu0 %v1071
        %v1073 = vand.u32 %v349, 4294901760
        %1074 = vmatpush.msra.mxu0 %v1073
        %v1075 = vand.u32 %v348, 4294901760
        %1076 = vmatpush.msra.mxu0 %v1075
        %v1077 = vand.u32 %v347, 4294901760
        %1078 = vmatpush.msra.mxu0 %v1077
        %v1079 = vand.u32 %v346, 4294901760
        %1080 = vmatpush.msra.mxu0 %v1079
        %v1081 = vand.u32 %v345, 4294901760
        %1082 = vmatpush.msra.mxu0 %v1081
        %v1083 = vand.u32 %v344, 4294901760
        %1084 = vmatpush.msra.mxu0 %v1083
        %v1085 = vand.u32 %v343, 4294901760
        %1086 = vmatpush.msra.mxu0 %v1085
        %v1087 = vand.u32 %v342, 4294901760
        %1088 = vmatpush.msra.mxu0 %v1087
        %v1089 = vand.u32 %v341, 4294901760
        %1090 = vmatpush.msra.mxu0 %v1089
        %v1091 = vand.u32 %v340, 4294901760
        %1092 = vmatpush.msra.mxu0 %v1091
        %v1093 = vand.u32 %v728, 4294901760
        %1094 = vmatmul.f32.gmra.mxu0 %v1093
        %v1095 = vpop.f32.mrf.mxu0
        %v1096 = vadd.f32 %v1055, %v1095
        %v1097 = vand.u32 %v729, 4294901760
        %1098 = vmatmul.f32.gmra.mxu0 %v1097
        %v1099 = vpop.f32.mrf.mxu0
        %v1100 = vadd.f32 %v1059, %v1099
        %1101 = vdwg.mxu0
        %v1102 = vmul.f32 %v722, %v722
        %v1103 = vmul.f32 %v726, %v726
        %v1104 = vsub.f32 %v1096, %v1102
        %v1105 = vsub.f32 %v1100, %v1103
        %v1106 = vmax.f32 %v1104, 0.0
        %v1107 = vmax.f32 %v1105, 0.0
        %v1108 = vsub.f32 %v338, %v722
        %v1109 = vsub.f32 %v339, %v726
        %v1110 = vadd.f32 %v1106, 1e-05
        %v1111 = vadd.f32 %v1107, 1e-05
        %v1112 = vrsqrt.pop %v1110
        %v1113 = vmul.f32 %v1112, %v1110
        %v1114 = vmul.f32 %v1113, %v1112
        %v1115 = vmul.f32 0.5, %v1114
        %v1116 = vsub.f32 1.5, %v1115
        %v1117 = vmul.f32 %v1112, %v1116
        %vm1118 = vweird.f32 %v1110
        %vm1119 = vweird.f32 %v1112
        %vm1120 = vmor %vm1118, %vm1119
        %v1121 = vsel %vm1120, %v1112, %v1117
        %v1122 = vrsqrt.pop %v1111
        %v1123 = vmul.f32 %v1122, %v1111
        %v1124 = vmul.f32 %v1123, %v1122
        %v1125 = vmul.f32 0.5, %v1124
        %v1126 = vsub.f32 1.5, %v1125
        %v1127 = vmul.f32 %v1122, %v1126
        %vm1128 = vweird.f32 %v1111
        %vm1129 = vweird.f32 %v1122
        %vm1130 = vmor %vm1128, %vm1129
        %v1131 = vsel %vm1130, %v1122, %v1127
        %v1132 = vmul.f32 %v1108, %v1121
        %v1133 = vmul.f32 %v1109, %v1131
        %v1134 = vpack.c.bf16 %v1133, %v1132
        %v1135 = vld [vmem:[#allocation7] sm:$0xff]
        %v1136 = vld [vmem:[#allocation7 + $0x8] sm:$0xff]
        %v1137 = vld [vmem:[#allocation7 + $0x10] sm:$0xff]
        %v1138 = vld [vmem:[#allocation7 + $0x18] sm:$0xff]
        %v1139 = vld [vmem:[#allocation7 + $0x20] sm:$0xff]
        %v1140 = vld [vmem:[#allocation7 + $0x28] sm:$0xff]
        %v1141 = vld [vmem:[#allocation7 + $0x30] sm:$0xff]
        %v1142 = vld [vmem:[#allocation7 + $0x38] sm:$0xff]
        %v1143 = vld [vmem:[#allocation7 + $0x40] sm:$0xff]
        %v1144 = vld [vmem:[#allocation7 + $0x48] sm:$0xff]
        %v1145 = vld [vmem:[#allocation7 + $0x50] sm:$0xff]
        %v1146 = vld [vmem:[#allocation7 + $0x58] sm:$0xff]
        %v1147 = vld [vmem:[#allocation7 + $0x60] sm:$0xff]
        %v1148 = vld [vmem:[#allocation7 + $0x68] sm:$0xff]
        %v1149 = vld [vmem:[#allocation7 + $0x70] sm:$0xff]
        %v1150 = vld [vmem:[#allocation7 + $0x78] sm:$0xff]
        %v1151 = vld [vmem:[#allocation7 + $0x80] sm:$0xff]
        %v1152 = vld [vmem:[#allocation7 + $0x88] sm:$0xff]
        %v1153 = vld [vmem:[#allocation7 + $0x90] sm:$0xff]
        %v1154 = vld [vmem:[#allocation7 + $0x98] sm:$0xff]
        %v1155 = vld [vmem:[#allocation7 + $0xa0] sm:$0xff]
        %v1156 = vld [vmem:[#allocation7 + $0xa8] sm:$0xff]
        %v1157 = vld [vmem:[#allocation7 + $0xb0] sm:$0xff]
        %v1158 = vld [vmem:[#allocation7 + $0xb8] sm:$0xff]
        %v1159 = vld [vmem:[#allocation7 + $0xc0] sm:$0xff]
        %v1160 = vld [vmem:[#allocation7 + $0xc8] sm:$0xff]
        %v1161 = vld [vmem:[#allocation7 + $0xd0] sm:$0xff]
        %v1162 = vld [vmem:[#allocation7 + $0xd8] sm:$0xff]
        %v1163 = vld [vmem:[#allocation7 + $0xe0] sm:$0xff]
        %v1164 = vld [vmem:[#allocation7 + $0xe8] sm:$0xff]
        %v1165 = vld [vmem:[#allocation7 + $0xf0] sm:$0xff]
        %v1166 = vld [vmem:[#allocation7 + $0xf8] sm:$0xff]
        %v1199 = vunpack.c.l.b16 %v1135
        %v1200 = vunpack.c.h.b16 %v1135
        %v1201 = vunpack.c.l.b16 %v1136
        %v1202 = vunpack.c.h.b16 %v1136
        %v1203 = vunpack.c.l.b16 %v1137
        %v1204 = vunpack.c.h.b16 %v1137
        %v1205 = vunpack.c.l.b16 %v1138
        %v1206 = vunpack.c.h.b16 %v1138
        %v1207 = vunpack.c.l.b16 %v1139
        %v1208 = vunpack.c.h.b16 %v1139
        %v1209 = vunpack.c.l.b16 %v1140
        %v1210 = vunpack.c.h.b16 %v1140
        %v1211 = vunpack.c.l.b16 %v1141
        %v1212 = vunpack.c.h.b16 %v1141
        %v1213 = vunpack.c.l.b16 %v1142
        %v1214 = vunpack.c.h.b16 %v1142
        %v1215 = vunpack.c.l.b16 %v1143
        %v1216 = vunpack.c.h.b16 %v1143
        %v1217 = vunpack.c.l.b16 %v1144
        %v1218 = vunpack.c.h.b16 %v1144
        %v1219 = vunpack.c.l.b16 %v1145
        %v1220 = vunpack.c.h.b16 %v1145
        %v1221 = vunpack.c.l.b16 %v1146
        %v1222 = vunpack.c.h.b16 %v1146
        %v1223 = vunpack.c.l.b16 %v1147
        %v1224 = vunpack.c.h.b16 %v1147
        %v1225 = vunpack.c.l.b16 %v1148
        %v1226 = vunpack.c.h.b16 %v1148
        %v1227 = vunpack.c.l.b16 %v1149
        %v1228 = vunpack.c.h.b16 %v1149
        %v1229 = vunpack.c.l.b16 %v1150
        %v1230 = vunpack.c.h.b16 %v1150
        %v1231 = vunpack.c.l.b16 %v1151
        %v1232 = vunpack.c.h.b16 %v1151
        %v1233 = vunpack.c.l.b16 %v1152
        %v1234 = vunpack.c.h.b16 %v1152
        %v1235 = vunpack.c.l.b16 %v1153
        %v1236 = vunpack.c.h.b16 %v1153
        %v1237 = vunpack.c.l.b16 %v1154
        %v1238 = vunpack.c.h.b16 %v1154
        %v1239 = vunpack.c.l.b16 %v1155
        %v1240 = vunpack.c.h.b16 %v1155
        %v1241 = vunpack.c.l.b16 %v1156
        %v1242 = vunpack.c.h.b16 %v1156
        %v1243 = vunpack.c.l.b16 %v1157
        %v1244 = vunpack.c.h.b16 %v1157
        %v1245 = vunpack.c.l.b16 %v1158
        %v1246 = vunpack.c.h.b16 %v1158
        %v1247 = vunpack.c.l.b16 %v1159
        %v1248 = vunpack.c.h.b16 %v1159
        %v1249 = vunpack.c.l.b16 %v1160
        %v1250 = vunpack.c.h.b16 %v1160
        %v1251 = vunpack.c.l.b16 %v1161
        %v1252 = vunpack.c.h.b16 %v1161
        %v1253 = vunpack.c.l.b16 %v1162
        %v1254 = vunpack.c.h.b16 %v1162
        %v1255 = vunpack.c.l.b16 %v1163
        %v1256 = vunpack.c.h.b16 %v1163
        %v1257 = vunpack.c.l.b16 %v1164
        %v1258 = vunpack.c.h.b16 %v1164
        %v1259 = vunpack.c.l.b16 %v1165
        %v1260 = vunpack.c.h.b16 %v1165
        %v1261 = vunpack.c.l.b16 %v1166
        %v1262 = vunpack.c.h.b16 %v1166
        %v1263 = vpack.c.b16 %v1203, %v1199
        %v1264 = vpack.c.b16 %v1204, %v1200
        %v1265 = vpack.c.b16 %v1205, %v1201
        %v1266 = vpack.c.b16 %v1206, %v1202
        %v1267 = vpack.c.b16 %v1211, %v1207
        %v1268 = vpack.c.b16 %v1212, %v1208
        %v1269 = vpack.c.b16 %v1213, %v1209
        %v1270 = vpack.c.b16 %v1214, %v1210
        %v1271 = vpack.c.b16 %v1219, %v1215
        %v1272 = vpack.c.b16 %v1220, %v1216
        %v1273 = vpack.c.b16 %v1221, %v1217
        %v1274 = vpack.c.b16 %v1222, %v1218
        %v1275 = vpack.c.b16 %v1227, %v1223
        %v1276 = vpack.c.b16 %v1228, %v1224
        %v1277 = vpack.c.b16 %v1229, %v1225
        %v1278 = vpack.c.b16 %v1230, %v1226
        %v1279 = vpack.c.b16 %v1235, %v1231
        %v1280 = vpack.c.b16 %v1236, %v1232
        %v1281 = vpack.c.b16 %v1237, %v1233
        %v1282 = vpack.c.b16 %v1238, %v1234
        %v1283 = vpack.c.b16 %v1243, %v1239
        %v1284 = vpack.c.b16 %v1244, %v1240
        %v1285 = vpack.c.b16 %v1245, %v1241
        %v1286 = vpack.c.b16 %v1246, %v1242
        %v1287 = vpack.c.b16 %v1251, %v1247
        %v1288 = vpack.c.b16 %v1252, %v1248
        %v1289 = vpack.c.b16 %v1253, %v1249
        %v1290 = vpack.c.b16 %v1254, %v1250
        %v1291 = vpack.c.b16 %v1259, %v1255
        %v1292 = vpack.c.b16 %v1260, %v1256
        %v1293 = vpack.c.b16 %v1261, %v1257
        %v1294 = vpack.c.b16 %v1262, %v1258
        %1327 = vmatpush.bf16.msra.mxu0 %v1291
        %1328 = vmatpush.bf16.msra.mxu0 %v1287
        %1329 = vmatpush.bf16.msra.mxu0 %v1283
        %1330 = vmatpush.bf16.msra.mxu0 %v1279
        %1331 = vmatpush.bf16.msra.mxu0 %v1275
        %1332 = vmatpush.bf16.msra.mxu0 %v1271
        %1333 = vmatpush.bf16.msra.mxu0 %v1267
        %1334 = vmatpush.bf16.msra.mxu0 %v1263
        %1335 = vmatmul.bf16.gmra.mxu0 %v1134
        %v1336 = vpop.f32.mrf.mxu0
        %v1337 = vadd.f32 0.0, %v1336
        %v1338 = vpop.f32.mrf.mxu0
        %v1339 = vadd.f32 0.0, %v1338
        %1340 = vdwg.mxu0
        %1341 = vmatpush.bf16.msra.mxu0 %v1292
        %1342 = vmatpush.bf16.msra.mxu0 %v1288
        %1343 = vmatpush.bf16.msra.mxu0 %v1284
        %1344 = vmatpush.bf16.msra.mxu0 %v1280
        %1345 = vmatpush.bf16.msra.mxu0 %v1276
        %1346 = vmatpush.bf16.msra.mxu0 %v1272
        %1347 = vmatpush.bf16.msra.mxu0 %v1268
        %1348 = vmatpush.bf16.msra.mxu0 %v1264
        %1349 = vmatmul.bf16.gmra.mxu0 %v1134
        %v1350 = vpop.f32.mrf.mxu0
        %v1351 = vadd.f32 0.0, %v1350
        %v1352 = vpop.f32.mrf.mxu0
        %v1353 = vadd.f32 0.0, %v1352
        %1354 = vdwg.mxu0
        %1355 = vmatpush.bf16.msra.mxu0 %v1293
        %1356 = vmatpush.bf16.msra.mxu0 %v1289
        %1357 = vmatpush.bf16.msra.mxu0 %v1285
        %1358 = vmatpush.bf16.msra.mxu0 %v1281
        %1359 = vmatpush.bf16.msra.mxu0 %v1277
        %1360 = vmatpush.bf16.msra.mxu0 %v1273
        %1361 = vmatpush.bf16.msra.mxu0 %v1269
        %1362 = vmatpush.bf16.msra.mxu0 %v1265
        %1363 = vmatmul.bf16.gmra.mxu0 %v1134
        %v1364 = vpop.f32.mrf.mxu0
        %v1365 = vadd.f32 0.0, %v1364
        %v1366 = vpop.f32.mrf.mxu0
        %v1367 = vadd.f32 0.0, %v1366
        %1368 = vdwg.mxu0
        %1369 = vmatpush.bf16.msra.mxu0 %v1294
        %1370 = vmatpush.bf16.msra.mxu0 %v1290
        %1371 = vmatpush.bf16.msra.mxu0 %v1286
        %1372 = vmatpush.bf16.msra.mxu0 %v1282
        %1373 = vmatpush.bf16.msra.mxu0 %v1278
        %1374 = vmatpush.bf16.msra.mxu0 %v1274
        %1375 = vmatpush.bf16.msra.mxu0 %v1270
        %1376 = vmatpush.bf16.msra.mxu0 %v1266
        %1377 = vmatmul.bf16.gmra.mxu0 %v1134
        %v1378 = vpop.f32.mrf.mxu0
        %v1379 = vadd.f32 0.0, %v1378
        %v1380 = vpop.f32.mrf.mxu0
        %v1381 = vadd.f32 0.0, %v1380
        %1382 = vdwg.mxu0
        %v1383 = vpack.c.bf16 %v1351, %v1337
        %v1384 = vpack.c.bf16 %v1379, %v1365
        %v1385 = vpack.c.bf16 %v1353, %v1339
        %v1386 = vpack.c.bf16 %v1381, %v1367
        %v1387 = vld [vmem:[#allocation8] sm:$0xf]
        %1389 = vst [vmem:[#allocation1] ss:$9 sm:$0xff] %v1387
        %v1390 = vld [vmem:[#allocation1] sm:$0xff]
        %v1391 = vld [vmem:[#allocation1 + $0x9] sm:$0xff]
        %v1392 = vld [vmem:[#allocation1 + $0x12] sm:$0xff]
        %v1393 = vld [vmem:[#allocation1 + $0x1b] sm:$0xff]
        %v1394 = vpack.i.b16 %v1390, %v1390
        %v1396 = vperm.slane %v1394, 0
        %v1397 = vpack.i.b16 %v1391, %v1391
        %v1399 = vperm.slane %v1397, 0
        %v1400 = vpack.i.b16 %v1392, %v1392
        %v1402 = vperm.slane %v1400, 0
        %v1403 = vpack.i.b16 %v1393, %v1393
        %v1405 = vperm.slane %v1403, 0
        %v1406 = vunpack.c.l.bf16 %v1383
        %v1407 = vunpack.c.h.bf16 %v1383
        %v1408 = vunpack.c.l.bf16 %v1384
        %v1409 = vunpack.c.h.bf16 %v1384
        %v1410 = vunpack.c.l.bf16 %v1385
        %v1411 = vunpack.c.h.bf16 %v1385
        %v1412 = vunpack.c.l.bf16 %v1386
        %v1413 = vunpack.c.h.bf16 %v1386
        %v1414 = vunpack.c.l.bf16 %v1396
        %v1415 = vunpack.c.l.bf16 %v1399
        %v1416 = vunpack.c.l.bf16 %v1402
        %v1417 = vunpack.c.l.bf16 %v1405
        %v1418 = vadd.f32 %v1406, %v1414
        %v1419 = vadd.f32 %v1407, %v1415
        %v1420 = vadd.f32 %v1408, %v1416
        %v1421 = vadd.f32 %v1409, %v1417
        %v1422 = vadd.f32 %v1410, %v1414
        %v1423 = vadd.f32 %v1411, %v1415
        %v1424 = vadd.f32 %v1412, %v1416
        %v1425 = vadd.f32 %v1413, %v1417
        %v1426 = vpack.c.bf16 %v1419, %v1418
        %v1427 = vpack.c.bf16 %v1421, %v1420
        %v1428 = vpack.c.bf16 %v1423, %v1422
        %v1429 = vpack.c.bf16 %v1425, %v1424
        %v1430 = vunpack.c.l.bf16 %v1426
        %v1431 = vunpack.c.h.bf16 %v1426
        %v1432 = vunpack.c.l.bf16 %v1427
        %v1433 = vunpack.c.h.bf16 %v1427
        %v1434 = vunpack.c.l.bf16 %v1428
        %v1435 = vunpack.c.h.bf16 %v1428
        %v1436 = vunpack.c.l.bf16 %v1429
        %v1437 = vunpack.c.h.bf16 %v1429
        %v1438 = vmax.f32 %v1430, 0.0
        %v1439 = vmax.f32 %v1431, 0.0
        %v1440 = vmax.f32 %v1432, 0.0
        %v1441 = vmax.f32 %v1433, 0.0
        %v1442 = vmax.f32 %v1434, 0.0
        %v1443 = vmax.f32 %v1435, 0.0
        %v1444 = vmax.f32 %v1436, 0.0
        %v1445 = vmax.f32 %v1437, 0.0
        %v1446 = vpack.c.bf16 %v1442, %v1438
        %v1447 = vpack.c.bf16 %v1443, %v1439
        %v1448 = vpack.c.bf16 %v1444, %v1440
        %v1449 = vpack.c.bf16 %v1445, %v1441
        %v1450 = vld [vmem:[#allocation10] sm:$0xf]
        %v1451 = vld [vmem:[#allocation10 + $0x4] sm:$0xf]
        %v1452 = vld [vmem:[#allocation10 + $0x8] sm:$0xf]
        %v1453 = vld [vmem:[#allocation10 + $0xc] sm:$0xf]
        %v1454 = vld [vmem:[#allocation10 + $0x10] sm:$0xf]
        %v1455 = vld [vmem:[#allocation10 + $0x14] sm:$0xf]
        %v1456 = vld [vmem:[#allocation10 + $0x18] sm:$0xf]
        %v1457 = vld [vmem:[#allocation10 + $0x1c] sm:$0xf]
        %v1458 = vld [vmem:[#allocation10 + $0x20] sm:$0xf]
        %v1459 = vld [vmem:[#allocation10 + $0x24] sm:$0xf]
        %v1460 = vld [vmem:[#allocation10 + $0x28] sm:$0xf]
        %v1461 = vld [vmem:[#allocation10 + $0x2c] sm:$0xf]
        %v1462 = vld [vmem:[#allocation10 + $0x30] sm:$0xf]
        %v1463 = vld [vmem:[#allocation10 + $0x34] sm:$0xf]
        %v1464 = vld [vmem:[#allocation10 + $0x38] sm:$0xf]
        %v1465 = vld [vmem:[#allocation10 + $0x3c] sm:$0xf]
        %v1466 = vld [vmem:[#allocation10 + $0x40] sm:$0xf]
        %v1467 = vld [vmem:[#allocation10 + $0x44] sm:$0xf]
        %v1468 = vld [vmem:[#allocation10 + $0x48] sm:$0xf]
        %v1469 = vld [vmem:[#allocation10 + $0x4c] sm:$0xf]
        %v1470 = vld [vmem:[#allocation10 + $0x50] sm:$0xf]
        %v1471 = vld [vmem:[#allocation10 + $0x54] sm:$0xf]
        %v1472 = vld [vmem:[#allocation10 + $0x58] sm:$0xf]
        %v1473 = vld [vmem:[#allocation10 + $0x5c] sm:$0xf]
        %v1474 = vld [vmem:[#allocation10 + $0x60] sm:$0xf]
        %v1475 = vld [vmem:[#allocation10 + $0x64] sm:$0xf]
        %v1476 = vld [vmem:[#allocation10 + $0x68] sm:$0xf]
        %v1477 = vld [vmem:[#allocation10 + $0x6c] sm:$0xf]
        %v1478 = vld [vmem:[#allocation10 + $0x70] sm:$0xf]
        %v1479 = vld [vmem:[#allocation10 + $0x74] sm:$0xf]
        %v1480 = vld [vmem:[#allocation10 + $0x78] sm:$0xf]
        %v1481 = vld [vmem:[#allocation10 + $0x7c] sm:$0xf]
        %v1482 = vld [vmem:[#allocation10 + $0x80] sm:$0xf]
        %v1483 = vld [vmem:[#allocation10 + $0x84] sm:$0xf]
        %v1484 = vld [vmem:[#allocation10 + $0x88] sm:$0xf]
        %v1485 = vld [vmem:[#allocation10 + $0x8c] sm:$0xf]
        %v1486 = vld [vmem:[#allocation10 + $0x90] sm:$0xf]
        %v1487 = vld [vmem:[#allocation10 + $0x94] sm:$0xf]
        %v1488 = vld [vmem:[#allocation10 + $0x98] sm:$0xf]
        %v1489 = vld [vmem:[#allocation10 + $0x9c] sm:$0xf]
        %v1490 = vld [vmem:[#allocation10 + $0xa0] sm:$0xf]
        %v1491 = vld [vmem:[#allocation10 + $0xa4] sm:$0xf]
        %v1492 = vld [vmem:[#allocation10 + $0xa8] sm:$0xf]
        %v1493 = vld [vmem:[#allocation10 + $0xac] sm:$0xf]
        %v1494 = vld [vmem:[#allocation10 + $0xb0] sm:$0xf]
        %v1495 = vld [vmem:[#allocation10 + $0xb4] sm:$0xf]
        %v1496 = vld [vmem:[#allocation10 + $0xb8] sm:$0xf]
        %v1497 = vld [vmem:[#allocation10 + $0xbc] sm:$0xf]
        %v1498 = vld [vmem:[#allocation10 + $0xc0] sm:$0xf]
        %v1499 = vld [vmem:[#allocation10 + $0xc4] sm:$0xf]
        %v1500 = vld [vmem:[#allocation10 + $0xc8] sm:$0xf]
        %v1501 = vld [vmem:[#allocation10 + $0xcc] sm:$0xf]
        %v1502 = vld [vmem:[#allocation10 + $0xd0] sm:$0xf]
        %v1503 = vld [vmem:[#allocation10 + $0xd4] sm:$0xf]
        %v1504 = vld [vmem:[#allocation10 + $0xd8] sm:$0xf]
        %v1505 = vld [vmem:[#allocation10 + $0xdc] sm:$0xf]
        %v1506 = vld [vmem:[#allocation10 + $0xe0] sm:$0xf]
        %v1507 = vld [vmem:[#allocation10 + $0xe4] sm:$0xf]
        %v1508 = vld [vmem:[#allocation10 + $0xe8] sm:$0xf]
        %v1509 = vld [vmem:[#allocation10 + $0xec] sm:$0xf]
        %v1510 = vld [vmem:[#allocation10 + $0xf0] sm:$0xf]
        %v1511 = vld [vmem:[#allocation10 + $0xf4] sm:$0xf]
        %v1512 = vld [vmem:[#allocation10 + $0xf8] sm:$0xf]
        %v1513 = vld [vmem:[#allocation10 + $0xfc] sm:$0xf]
        %v1578 = vunpack.c.l.b16 %v1450
        %v1579 = vunpack.c.l.b16 %v1451
        %v1580 = vunpack.c.l.b16 %v1452
        %v1581 = vunpack.c.l.b16 %v1453
        %v1582 = vunpack.c.l.b16 %v1454
        %v1583 = vunpack.c.l.b16 %v1455
        %v1584 = vunpack.c.l.b16 %v1456
        %v1585 = vunpack.c.l.b16 %v1457
        %v1586 = vunpack.c.l.b16 %v1458
        %v1587 = vunpack.c.l.b16 %v1459
        %v1588 = vunpack.c.l.b16 %v1460
        %v1589 = vunpack.c.l.b16 %v1461
        %v1590 = vunpack.c.l.b16 %v1462
        %v1591 = vunpack.c.l.b16 %v1463
        %v1592 = vunpack.c.l.b16 %v1464
        %v1593 = vunpack.c.l.b16 %v1465
        %v1594 = vunpack.c.l.b16 %v1466
        %v1595 = vunpack.c.l.b16 %v1467
        %v1596 = vunpack.c.l.b16 %v1468
        %v1597 = vunpack.c.l.b16 %v1469
        %v1598 = vunpack.c.l.b16 %v1470
        %v1599 = vunpack.c.l.b16 %v1471
        %v1600 = vunpack.c.l.b16 %v1472
        %v1601 = vunpack.c.l.b16 %v1473
        %v1602 = vunpack.c.l.b16 %v1474
        %v1603 = vunpack.c.l.b16 %v1475
        %v1604 = vunpack.c.l.b16 %v1476
        %v1605 = vunpack.c.l.b16 %v1477
        %v1606 = vunpack.c.l.b16 %v1478
        %v1607 = vunpack.c.l.b16 %v1479
        %v1608 = vunpack.c.l.b16 %v1480
        %v1609 = vunpack.c.l.b16 %v1481
        %v1610 = vunpack.c.l.b16 %v1482
        %v1611 = vunpack.c.l.b16 %v1483
        %v1612 = vunpack.c.l.b16 %v1484
        %v1613 = vunpack.c.l.b16 %v1485
        %v1614 = vunpack.c.l.b16 %v1486
        %v1615 = vunpack.c.l.b16 %v1487
        %v1616 = vunpack.c.l.b16 %v1488
        %v1617 = vunpack.c.l.b16 %v1489
        %v1618 = vunpack.c.l.b16 %v1490
        %v1619 = vunpack.c.l.b16 %v1491
        %v1620 = vunpack.c.l.b16 %v1492
        %v1621 = vunpack.c.l.b16 %v1493
        %v1622 = vunpack.c.l.b16 %v1494
        %v1623 = vunpack.c.l.b16 %v1495
        %v1624 = vunpack.c.l.b16 %v1496
        %v1625 = vunpack.c.l.b16 %v1497
        %v1626 = vunpack.c.l.b16 %v1498
        %v1627 = vunpack.c.l.b16 %v1499
        %v1628 = vunpack.c.l.b16 %v1500
        %v1629 = vunpack.c.l.b16 %v1501
        %v1630 = vunpack.c.l.b16 %v1502
        %v1631 = vunpack.c.l.b16 %v1503
        %v1632 = vunpack.c.l.b16 %v1504
        %v1633 = vunpack.c.l.b16 %v1505
        %v1634 = vunpack.c.l.b16 %v1506
        %v1635 = vunpack.c.l.b16 %v1507
        %v1636 = vunpack.c.l.b16 %v1508
        %v1637 = vunpack.c.l.b16 %v1509
        %v1638 = vunpack.c.l.b16 %v1510
        %v1639 = vunpack.c.l.b16 %v1511
        %v1640 = vunpack.c.l.b16 %v1512
        %v1641 = vunpack.c.l.b16 %v1513
        %v1642 = vpack.c.b16 %v1579, %v1578
        %v1643 = vpack.c.b16 %v1581, %v1580
        %v1644 = vpack.c.b16 %v1583, %v1582
        %v1645 = vpack.c.b16 %v1585, %v1584
        %v1646 = vpack.c.b16 %v1587, %v1586
        %v1647 = vpack.c.b16 %v1589, %v1588
        %v1648 = vpack.c.b16 %v1591, %v1590
        %v1649 = vpack.c.b16 %v1593, %v1592
        %v1650 = vpack.c.b16 %v1595, %v1594
        %v1651 = vpack.c.b16 %v1597, %v1596
        %v1652 = vpack.c.b16 %v1599, %v1598
        %v1653 = vpack.c.b16 %v1601, %v1600
        %v1654 = vpack.c.b16 %v1603, %v1602
        %v1655 = vpack.c.b16 %v1605, %v1604
        %v1656 = vpack.c.b16 %v1607, %v1606
        %v1657 = vpack.c.b16 %v1609, %v1608
        %v1658 = vpack.c.b16 %v1611, %v1610
        %v1659 = vpack.c.b16 %v1613, %v1612
        %v1660 = vpack.c.b16 %v1615, %v1614
        %v1661 = vpack.c.b16 %v1617, %v1616
        %v1662 = vpack.c.b16 %v1619, %v1618
        %v1663 = vpack.c.b16 %v1621, %v1620
        %v1664 = vpack.c.b16 %v1623, %v1622
        %v1665 = vpack.c.b16 %v1625, %v1624
        %v1666 = vpack.c.b16 %v1627, %v1626
        %v1667 = vpack.c.b16 %v1629, %v1628
        %v1668 = vpack.c.b16 %v1631, %v1630
        %v1669 = vpack.c.b16 %v1633, %v1632
        %v1670 = vpack.c.b16 %v1635, %v1634
        %v1671 = vpack.c.b16 %v1637, %v1636
        %v1672 = vpack.c.b16 %v1639, %v1638
        %v1673 = vpack.c.b16 %v1641, %v1640
        %1706 = vmatpush.bf16.msra.mxu0 %v1649
        %1707 = vmatpush.bf16.msra.mxu0 %v1648
        %1708 = vmatpush.bf16.msra.mxu0 %v1647
        %1709 = vmatpush.bf16.msra.mxu0 %v1646
        %1710 = vmatpush.bf16.msra.mxu0 %v1645
        %1711 = vmatpush.bf16.msra.mxu0 %v1644
        %1712 = vmatpush.bf16.msra.mxu0 %v1643
        %1713 = vmatpush.bf16.msra.mxu0 %v1642
        %1714 = vmatmul.bf16.gmra.mxu0 %v1446
        %v1715 = vpop.f32.mrf.mxu0
        %v1716 = vadd.f32 0.0, %v1715
        %v1717 = vpop.f32.mrf.mxu0
        %v1718 = vadd.f32 0.0, %v1717
        %1719 = vdwg.mxu0
        %1720 = vmatpush.bf16.msra.mxu0 %v1657
        %1721 = vmatpush.bf16.msra.mxu0 %v1656
        %1722 = vmatpush.bf16.msra.mxu0 %v1655
        %1723 = vmatpush.bf16.msra.mxu0 %v1654
        %1724 = vmatpush.bf16.msra.mxu0 %v1653
        %1725 = vmatpush.bf16.msra.mxu0 %v1652
        %1726 = vmatpush.bf16.msra.mxu0 %v1651
        %1727 = vmatpush.bf16.msra.mxu0 %v1650
        %1728 = vmatmul.bf16.gmra.mxu0 %v1447
        %v1729 = vpop.f32.mrf.mxu0
        %v1730 = vadd.f32 %v1716, %v1729
        %v1731 = vpop.f32.mrf.mxu0
        %v1732 = vadd.f32 %v1718, %v1731
        %1733 = vdwg.mxu0
        %1734 = vmatpush.bf16.msra.mxu0 %v1665
        %1735 = vmatpush.bf16.msra.mxu0 %v1664
        %1736 = vmatpush.bf16.msra.mxu0 %v1663
        %1737 = vmatpush.bf16.msra.mxu0 %v1662
        %1738 = vmatpush.bf16.msra.mxu0 %v1661
        %1739 = vmatpush.bf16.msra.mxu0 %v1660
        %1740 = vmatpush.bf16.msra.mxu0 %v1659
        %1741 = vmatpush.bf16.msra.mxu0 %v1658
        %1742 = vmatmul.bf16.gmra.mxu0 %v1448
        %v1743 = vpop.f32.mrf.mxu0
        %v1744 = vadd.f32 %v1730, %v1743
        %v1745 = vpop.f32.mrf.mxu0
        %v1746 = vadd.f32 %v1732, %v1745
        %1747 = vdwg.mxu0
        %1748 = vmatpush.bf16.msra.mxu0 %v1673
        %1749 = vmatpush.bf16.msra.mxu0 %v1672
        %1750 = vmatpush.bf16.msra.mxu0 %v1671
        %1751 = vmatpush.bf16.msra.mxu0 %v1670
        %1752 = vmatpush.bf16.msra.mxu0 %v1669
        %1753 = vmatpush.bf16.msra.mxu0 %v1668
        %1754 = vmatpush.bf16.msra.mxu0 %v1667
        %1755 = vmatpush.bf16.msra.mxu0 %v1666
        %1756 = vmatmul.bf16.gmra.mxu0 %v1449
        %v1757 = vpop.f32.mrf.mxu0
        %v1758 = vadd.f32 %v1744, %v1757
        %v1759 = vpop.f32.mrf.mxu0
        %v1760 = vadd.f32 %v1746, %v1759
        %1761 = vdwg.mxu0
        %v1762 = vadd.f32 %v338, %v1758
        %v1763 = vadd.f32 %v339, %v1760
        %v1764 = vld [vmem:[%s5] sm:$0x1]
        %v1766 = vperm.slane %v1764, 0
        %v1768 = vadd.f32 %v1762, %v1766
        %v1769 = vadd.f32 %v1763, %v1766
        %1770 = vst [vmem:[%s335] sm:$0xff] %v1768
        %1771 = vst [vmem:[%s335 + $0x8] sm:$0xff] %v1769
        %s1772 = sand.u32 %s164, 1
        %s1773 = scalar_lea.sflag [#allocation4], %s1772
        %s1774 = sand.u32 %s164, 1
        %s1775 = smul.addr %s1774, 16
        %s1776 = scalar_lea.vmem [#allocation11], %s1775
        // Predicated region
        $region65: #{tpu_custom_call.1} parent=43 // pred_check
          %p1777 = pneg %p174
        $region66: #{tpu_custom_call.1} parent=43 // pred_check_branch
          %1779 = sbr.rel (%p1777) target = $region68
        $region67: #{tpu_custom_call.1} parent=43 // pred_region
          %s1780 = smul.u32 2, %s25
          %1782 = vsyncadd %s1773, 0
          %s1783 = smul.addr %s1780, 8
          %s1784 = scalar_lea.hbm %s6, %s1783
          %s1785 = sshll.u32 %s1776, 4
          %s1786 = int_to_ptr.vmem [resolvable:$true] %s1785
          %s1787 = sshll.u32 %s1784, 4
          %s1788 = int_to_ptr.hbm [resolvable:$true] %s1787
          %1793 = dma.vmem_to_hbm [thread:$0]  %s1786, 256, %s1788, %s1773, 128, 128, 8
        $region68: #{tpu_custom_call.1} parent=43 // pred_fallthru
          _
      $region44: #{tpu_custom_call.1} parent=5 // pred_fallthru
        _
      %p1794 = scmp.le.s32.totalorder 2, %s20
      // Predicated region
      $region69: #{tpu_custom_call.1} parent=5 // pred_check
        %p1795 = pneg %p1794
      $region70: #{tpu_custom_call.1} parent=5 // pred_check_branch
        %1797 = sbr.rel (%p1795) target = $region72
      $region71: #{tpu_custom_call.1} parent=5 // pred_region
        %s1798 = ssub.s32 %s20, 2
        // Predicated region
        $region73: #{tpu_custom_call.1} parent=71 // pred_check
          %p1799 = pneg %p180
        $region74: #{tpu_custom_call.1} parent=71 // pred_check_branch
          %1801 = sbr.rel (%p1799) target = $region76
        $region75: #{tpu_custom_call.1} parent=71 // pred_region
          %s1802 = sand.u32 %s165, 1
          %s1803 = scalar_lea.sflag [#allocation4], %s1802
          %s1804 = sand.u32 %s165, 1
          %s1805 = smul.addr %s1804, 16
          %s1806 = scalar_lea.vmem [#allocation11], %s1805
          %1808 = dma.done %s1803, 256
        $region76: #{tpu_custom_call.1} parent=71 // pred_fallthru
          _
      $region72: #{tpu_custom_call.1} parent=5 // pred_fallthru
        _
    $region6: #{tpu_custom_call.1} parent=1 // loop_footer
      %s24 = sadd.s32 1, %s20
    $region7: #{tpu_custom_call.1} parent=1 // loop_footer_branch
      %19 = sbr.rel target = $region3
    $region8: #{tpu_custom_call.1} parent=1 // loop_exit
      _
    %1809 = vsyncpa [#allocation3], 1
    %s1810 = scalar_lea.sflag [#allocation3], 1
    %1811 = vsyncpa %s1810, 1
    %1812 = vsyncpa [#allocation6], 1
    %1813 = vsyncpa [#allocation9], 1
    %1814 = vsyncpa [#allocation4], 1
    %s1815 = scalar_lea.sflag [#allocation4], 1
    %1816 = vsyncpa %s1815, 1

</llo_original>
